<compile_context>
chip_gen: v7x
topology: tpu7x:2x2x1
jax: 0.10.0
libtpu: 0.0.40
codegen_flags: <defaults>
</compile_context>

<pallas_src>
import functools

import jax
import jax.numpy as jnp
from jax.experimental import pallas as pl
from jax.experimental.pallas import tpu as pltpu


# ----------------------------------------------------------------------------
# Pallas kernel: one grid step processes `tile_n` points (=> tile_n*K rows).
# All K-neighbor work is folded into the lane dimension.
# ----------------------------------------------------------------------------
def middle_decoder_kernel(anchor_ref, feat_ref,
                          wn_ref, bn_ref,
                          w1_ref, b1_ref,
                          w2_ref, b2_ref,
                          w3_ref, b3_ref,
                          out_pts_ref, out_feat_ref,
                          *, radius):
    wdt = wn_ref.dtype                      # bf16 fast path / f32 exact path
    feat = feat_ref[...]                    # (TN, C) f32

    # --- synthetic neighborhood decoder: tanh(linear) -> relative points ----
    # wn_ref is zero-padded over the feature_features rows, so this equals
    # tanh(point_features @ wn + bn).  Matmul in bf16, accumulate/tanh in f32.
    rel = jnp.tanh(
        jnp.dot(feat.astype(wdt), wn_ref[...],
                preferred_element_type=jnp.float32)
        + bn_ref[...])                                            # (TN, K*3)

    # --- fc1: single MXU push on concat([rel_k, features]) ------------------
    # w1_ref rows = [block-diag_K(w1_rel) ; 0 (point-feature rows) ; tile_K(w1f)]
    x = jnp.concatenate([rel, feat], axis=1).astype(wdt)          # (TN, K*3+C)
    h1 = jnp.maximum(
        jnp.dot(x, w1_ref[...], preferred_element_type=jnp.float32)
        + b1_ref[...], 0.0)                                       # (TN, K*H1)

    # --- fc2, fc3 (block-diagonal weights, lane-tiled biases) ---------------
    h2 = jnp.maximum(
        jnp.dot(h1.astype(wdt), w2_ref[...],
                preferred_element_type=jnp.float32)
        + b2_ref[...], 0.0)                                       # (TN, K*H2)
    h3 = jnp.maximum(
        jnp.dot(h2.astype(wdt), w3_ref[...],
                preferred_element_type=jnp.float32)
        + b3_ref[...], 0.0)                                       # (TN, K*H3)
    out_feat_ref[...] = h3.astype(out_feat_ref.dtype)             # lane-dense

    # --- output_points = repeat_interleave(points, K) + rel * radius --------
    # anchor is already lane-tiled to (TN, K*3) in the wrapper.
    out_pts_ref[...] = (anchor_ref[...] + rel * radius).astype(out_pts_ref.dtype)


# ----------------------------------------------------------------------------
# One-time weight packing (hoisted out of the per-forward path).
# ----------------------------------------------------------------------------
def _block_diag_k(w, K):
    """(din, dout) -> block-diagonal (K*din, K*dout)."""
    din, dout = w.shape
    eye = jnp.eye(K, dtype=w.dtype)
    return (eye[:, None, :, None] * w[None, :, None, :]).reshape(K * din,
                                                                 K * dout)


def prepare_packed_params(params, *, nb_neighbors, split, feature_size,
                          weight_dtype=jnp.bfloat16):
    """Pack raw per-layer weights into kernel-ready slabs.  Call ONCE."""
    K = nb_neighbors
    f32 = jnp.float32
    wn, bn, w1r, w1f, b1, w2, b2, w3, b3 = [jnp.asarray(p, f32) for p in params]
    H1 = w1r.shape[1]

    # Neighborhood-decoder weight, zero-padded so it consumes the full feature
    # row (only the first `split` columns contribute).
    wn_full = jnp.concatenate(
        [wn, jnp.zeros((feature_size, K * 3), f32)], axis=0)      # (C, K*3)

    # fc1 stacked weight for the in-kernel concat([rel, full_features]):
    #   rows = [block-diag_K(w1_rel) ; zeros(split) ; tile_K(w1_feat)]
    w1_full = jnp.concatenate([
        _block_diag_k(w1r, K),                                    # (K*3, K*H1)
        jnp.zeros((split, K * H1), f32),                          # point-feat rows
        jnp.tile(w1f, (1, K)),                                    # (F,   K*H1)
    ], axis=0)                                                    # (K*3+C, K*H1)
    b1_full = jnp.tile(b1, (1, K))                                # (1, K*H1)

    # fc2 / fc3: block-diagonal weights, lane-tiled biases.
    w2_blk = _block_diag_k(w2, K)                                 # (K*H1, K*H2)
    b2_full = jnp.tile(b2, (1, K))
    w3_blk = _block_diag_k(w3, K)                                 # (K*H2, K*H3)
    b3_full = jnp.tile(b3, (1, K))

    wd = weight_dtype
    # Weights in bf16 (MXU inputs); biases stay f32 (VPU adds).
    return (wn_full.astype(wd), bn,
            w1_full.astype(wd), b1_full,
            w2_blk.astype(wd), b2_full,
            w3_blk.astype(wd), b3_full)


def _round_up(x, m):
    return ((x + m - 1) // m) * m


# ----------------------------------------------------------------------------
# Forward wrapper: pad-and-slice over general N, lane-dense (N, K*X) slabs.
# ----------------------------------------------------------------------------
def middle_decoder_forward(points, features, batch, packed_params, *,
                           nb_neighbors, radius, split, feature_size,
                           tile_n=256, out_feat_dtype=jnp.float32):
    N = points.shape[0]
    K = nb_neighbors
    C = split + feature_size
    assert features.shape[1] == C
    f32 = jnp.float32

    (wn_full, bn, w1_full, b1_full,
     w2_blk, b2_full, w3_blk, b3_full) = packed_params
    H3 = w3_blk.shape[1] // K

    # anchor = repeat_interleave(points, K) realized as lane tiling (N, K*3).
    anchor = jnp.tile(points.astype(f32), (1, K))
    feats = features.astype(f32)

    # Pad N up to a multiple of tile_n (pad rows computed then sliced off).
    tile_n = _round_up(max(8, min(tile_n, N)), 8)
    N_pad = _round_up(N, tile_n)
    if N_pad != N:
        pad = N_pad - N
        anchor = jnp.pad(anchor, ((0, pad), (0, 0)))
        feats = jnp.pad(feats, ((0, pad), (0, 0)))

    def row_spec(width):
        return pl.BlockSpec((tile_n, width), lambda i: (i, 0))

    def full_spec(a):
        # Grid-invariant weight block (fetched once).  If K/hidden grow, the
        # block-diag slabs scale as (K*H)^2: single-buffer them and/or set
        # vmem_limit_bytes explicitly (v7x has only 64 MiB VMEM).
        return pl.BlockSpec(a.shape, lambda i: (0, 0))

    kernel = functools.partial(middle_decoder_kernel, radius=radius)

    out_pts_slab, out_feat_slab = pl.pallas_call(
        kernel,
        out_shape=(jax.ShapeDtypeStruct((N_pad, K * 3), f32),
                   jax.ShapeDtypeStruct((N_pad, K * H3), out_feat_dtype)),
        grid=(N_pad // tile_n,),
        in_specs=[
            row_spec(K * 3),                                      # anchor
            row_spec(C),                                          # features
            full_spec(wn_full), full_spec(bn),
            full_spec(w1_full), full_spec(b1_full),
            full_spec(w2_blk), full_spec(b2_full),
            full_spec(w3_blk), full_spec(b3_full),
        ],
        out_specs=(row_spec(K * 3), row_spec(K * H3)),
        compiler_params=pltpu.CompilerParams(
            dimension_semantics=("parallel",)),
    )(anchor, feats,
      wn_full, bn, w1_full, b1_full, w2_blk, b2_full, w3_blk, b3_full)

    # (N, K*X) row-major slabs -> (N*K, X): free contiguous reshapes giving
    # exactly the repeat_interleave (point-major neighbor) row order.
    out_pts = out_pts_slab[:N].reshape(N * K, 3)
    out_feat = out_feat_slab[:N].reshape(N * K, H3)

    # output_batch = batch.repeat_interleave(K)  (cheap glue, stays in JAX)
    output_batch = jnp.repeat(batch, K, axis=0)
    return out_pts, out_feat, output_batch


# ----------------------------------------------------------------------------
# Pure-JAX reference following the PyTorch forward (for correctness check).
# ----------------------------------------------------------------------------
def reference_forward(points, features, batch, params, *,
                      nb_neighbors, radius, split, feature_size):
    K = nb_neighbors
    wn, bn, w1r, w1f, b1, w2, b2, w3, b3 = params
    point_features = features[:, :split]
    feature_features = features[:, split:]

    rel = jnp.tanh(point_features @ wn + bn).reshape(-1, 3)       # (N*K, 3)
    feat_rep = jnp.repeat(feature_features, K, axis=0)            # (N*K, F)
    concat = jnp.concatenate([rel, feat_rep], axis=1)             # (N*K, 3+F)
    w1 = jnp.concatenate([w1r, w1f], axis=0)                      # (3+F, H1)
    h1 = jax.nn.relu(concat @ w1 + b1)
    h2 = jax.nn.relu(h1 @ w2 + b2)
    h3 = jax.nn.relu(h2 @ w3 + b3)
    anchor = jnp.repeat(points, K, axis=0)
    out_pts = anchor + rel * radius
    out_batch = jnp.repeat(batch, K, axis=0)
    return out_pts, h3, out_batch


def init_params(key, *, nb_neighbors, split, feature_size, hidden):
    H1, H2, H3 = hidden
    ks = jax.random.split(key, 8)
    s = 0.1
    wn = s * jax.random.normal(ks[0], (split, nb_neighbors * 3), jnp.float32)
    bn = s * jax.random.normal(ks[1], (1, nb_neighbors * 3), jnp.float32)
    w1r = s * jax.random.normal(ks[2], (3, H1), jnp.float32)
    w1f = s * jax.random.normal(ks[3], (feature_size, H1), jnp.float32)
    b1 = s * jax.random.normal(ks[4], (1, H1), jnp.float32)
    w2 = s * jax.random.normal(ks[5], (H1, H2), jnp.float32)
    b2 = s * jax.random.normal(ks[6], (1, H2), jnp.float32)
    w3 = s * jax.random.normal(ks[7], (H2, H3), jnp.float32)
    b3 = jnp.zeros((1, H3), jnp.float32)
    return (wn, bn, w1r, w1f, b1, w2, b2, w3, b3)


if __name__ == "__main__":
    # Small but TPU-friendly shapes consistent with the module.
    N = 2000              # number of input points (not a tile multiple: tests
                          # the pad-and-slice path); grid = 8 steps of 256 rows
    nb_neighbors = 4      # K
    radius = 0.1
    split = 4             # point-feature channels consumed by neighborhood dec
    feature_size = 32     # feature channels fed to the MLP
    hidden = (64, 64, 32)  # features=[f0, f1, f2]
    tile_n = 256          # 256-row MXU tiles; K*H = 256-wide lane slabs

    key = jax.random.PRNGKey(0)
    kp, kf, kpt = jax.random.split(key, 3)

    points = jax.random.normal(kpt, (N, 3), jnp.float32)
    features = jax.random.normal(kf, (N, split + feature_size), jnp.float32)
    batch = jnp.repeat(jnp.arange(2, dtype=jnp.int32), N // 2)

    params = init_params(kp, nb_neighbors=nb_neighbors, split=split,
                         feature_size=feature_size, hidden=hidden)

    # Weight packing hoisted out of the forward path: done ONCE here.
    packed_bf16 = prepare_packed_params(
        params, nb_neighbors=nb_neighbors, split=split,
        feature_size=feature_size, weight_dtype=jnp.bfloat16)
    packed_f32 = prepare_packed_params(
        params, nb_neighbors=nb_neighbors, split=split,
        feature_size=feature_size, weight_dtype=jnp.float32)

    fwd = jax.jit(functools.partial(
        middle_decoder_forward,
        nb_neighbors=nb_neighbors, radius=radius,
        split=split, feature_size=feature_size, tile_n=tile_n))

    # bf16 fast path
    out_pts, out_feat, out_batch = fwd(points, features, batch, packed_bf16)
    jax.block_until_ready((out_pts, out_feat, out_batch))

    # Pure-JAX reference of the PyTorch forward.
    ref_pts, ref_feat, ref_batch = reference_forward(
        points, features, batch, params,
        nb_neighbors=nb_neighbors, radius=radius,
        split=split, feature_size=feature_size)

    assert out_pts.shape == (N * nb_neighbors, 3)
    assert out_feat.shape == (N * nb_neighbors, hidden[2])
    assert out_batch.shape == (N * nb_neighbors,)
    # bf16 MXU inputs with f32 accumulation -> loosened tolerance.
    assert jnp.allclose(out_pts, ref_pts, atol=1e-2, rtol=1e-2)
    assert jnp.allclose(out_feat, ref_feat, atol=5e-2, rtol=5e-2)
    assert jnp.array_equal(out_batch, ref_batch)

    # f32-packed path through the same kernel: tight tolerance.
    out_pts32, out_feat32, out_batch32 = fwd(points, features, batch, packed_f32)
    jax.block_until_ready((out_pts32, out_feat32, out_batch32))
    assert jnp.allclose(out_pts32, ref_pts, atol=1e-4, rtol=1e-4)
    assert jnp.allclose(out_feat32, ref_feat, atol=1e-4, rtol=1e-4)
    assert jnp.array_equal(out_batch32, ref_batch)

    print("KERNEL_OK")
</pallas_src>

<mosaic_0001>
module attributes {stable_mosaic.version = 11 : i64} {
  func.func @middle_decoder_kernel(%arg0: i32, %arg1: memref<256x12xf32, #tpu.memory_space<vmem>>, %arg2: memref<256x36xf32, #tpu.memory_space<vmem>>, %arg3: memref<36x12xbf16, #tpu.memory_space<vmem>>, %arg4: memref<1x12xf32, #tpu.memory_space<vmem>>, %arg5: memref<48x256xbf16, #tpu.memory_space<vmem>>, %arg6: memref<1x256xf32, #tpu.memory_space<vmem>>, %arg7: memref<256x256xbf16, #tpu.memory_space<vmem>>, %arg8: memref<1x256xf32, #tpu.memory_space<vmem>>, %arg9: memref<256x128xbf16, #tpu.memory_space<vmem>>, %arg10: memref<1x128xf32, #tpu.memory_space<vmem>>, %arg11: memref<256x12xf32, #tpu.memory_space<vmem>>, %arg12: memref<256x128xf32, #tpu.memory_space<vmem>>) attributes {dimension_semantics = [#tpu.dimension_semantics<parallel>], iteration_bounds = array<i64: 8>, scalar_prefetch = 0 : i64, scratch_operands = 0 : i64, tpu.core_type = #tpu.core_type<tc>, window_params = [{transform_indices = @transform_0, window_bounds = array<i64: 256, 12>}, {transform_indices = @transform_1, window_bounds = array<i64: 256, 36>}, {pipeline_mode = #tpu.pipeline_mode<synchronous>, transform_indices = @transform_2, window_bounds = array<i64: 36, 12>}, {pipeline_mode = #tpu.pipeline_mode<synchronous>, transform_indices = @transform_3, window_bounds = array<i64: 1, 12>}, {pipeline_mode = #tpu.pipeline_mode<synchronous>, transform_indices = @transform_4, window_bounds = array<i64: 48, 256>}, {pipeline_mode = #tpu.pipeline_mode<synchronous>, transform_indices = @transform_5, window_bounds = array<i64: 1, 256>}, {pipeline_mode = #tpu.pipeline_mode<synchronous>, transform_indices = @transform_6, window_bounds = array<i64: 256, 256>}, {pipeline_mode = #tpu.pipeline_mode<synchronous>, transform_indices = @transform_7, window_bounds = array<i64: 1, 256>}, {pipeline_mode = #tpu.pipeline_mode<synchronous>, transform_indices = @transform_8, window_bounds = array<i64: 256, 128>}, {pipeline_mode = #tpu.pipeline_mode<synchronous>, transform_indices = @transform_9, window_bounds = array<i64: 1, 128>}, {transform_indices = @transform_10, window_bounds = array<i64: 256, 12>}, {transform_indices = @transform_11, window_bounds = array<i64: 256, 128>}]} {
    %c0 = arith.constant 0 : index
    %c0_0 = arith.constant 0 : index
    %0 = vector.load %arg2[%c0, %c0_0] : memref<256x36xf32, #tpu.memory_space<vmem>>, vector<256x36xf32>
    %1 = arith.truncf %0 : vector<256x36xf32> to vector<256x36xbf16>
    %c0_1 = arith.constant 0 : index
    %c0_2 = arith.constant 0 : index
    %2 = vector.load %arg3[%c0_1, %c0_2] : memref<36x12xbf16, #tpu.memory_space<vmem>>, vector<36x12xbf16>
    %cst = arith.constant dense<0.000000e+00> : vector<256x12xf32>
    %3 = tpu.matmul %1, %2, %cst {dimension_numbers = #tpu.dot_dimension_numbers<[1], [0], [0], [1], [0, 0, 1, 1], [], []>} : vector<256x36xbf16>, vector<36x12xbf16>, vector<256x12xf32> -> vector<256x12xf32>
    %c0_3 = arith.constant 0 : index
    %c0_4 = arith.constant 0 : index
    %4 = vector.load %arg4[%c0_3, %c0_4] : memref<1x12xf32, #tpu.memory_space<vmem>>, vector<1x12xf32>
    %5 = vector.broadcast %4 : vector<1x12xf32> to vector<256x12xf32>
    %6 = arith.addf %3, %5 : vector<256x12xf32>
    %7 = math.tanh %6 : vector<256x12xf32>
    %8 = tpu.concatenate %7, %0 in 1 : vector<256x12xf32>, vector<256x36xf32> -> vector<256x48xf32>
    %9 = arith.truncf %8 : vector<256x48xf32> to vector<256x48xbf16>
    %c0_5 = arith.constant 0 : index
    %c0_6 = arith.constant 0 : index
    %10 = vector.load %arg5[%c0_5, %c0_6] : memref<48x256xbf16, #tpu.memory_space<vmem>>, vector<48x256xbf16>
    %cst_7 = arith.constant dense<0.000000e+00> : vector<256x256xf32>
    %11 = tpu.matmul %9, %10, %cst_7 {dimension_numbers = #tpu.dot_dimension_numbers<[1], [0], [0], [1], [0, 0, 1, 1], [], []>} : vector<256x48xbf16>, vector<48x256xbf16>, vector<256x256xf32> -> vector<256x256xf32>
    %c0_8 = arith.constant 0 : index
    %c0_9 = arith.constant 0 : index
    %12 = vector.load %arg6[%c0_8, %c0_9] : memref<1x256xf32, #tpu.memory_space<vmem>>, vector<1x256xf32>
    %13 = vector.broadcast %12 : vector<1x256xf32> to vector<256x256xf32>
    %14 = arith.addf %11, %13 : vector<256x256xf32>
    %cst_10 = arith.constant 0.000000e+00 : f32
    %15 = vector.broadcast %cst_10 : f32 to vector<256x256xf32>
    %16 = arith.maximumf %14, %15 : vector<256x256xf32>
    %17 = arith.truncf %16 : vector<256x256xf32> to vector<256x256xbf16>
    %c0_11 = arith.constant 0 : index
    %c0_12 = arith.constant 0 : index
    %18 = vector.load %arg7[%c0_11, %c0_12] : memref<256x256xbf16, #tpu.memory_space<vmem>>, vector<256x256xbf16>
    %cst_13 = arith.constant dense<0.000000e+00> : vector<256x256xf32>
    %19 = tpu.matmul %17, %18, %cst_13 {dimension_numbers = #tpu.dot_dimension_numbers<[1], [0], [0], [1], [0, 0, 1, 1], [], []>} : vector<256x256xbf16>, vector<256x256xbf16>, vector<256x256xf32> -> vector<256x256xf32>
    %c0_14 = arith.constant 0 : index
    %c0_15 = arith.constant 0 : index
    %20 = vector.load %arg8[%c0_14, %c0_15] : memref<1x256xf32, #tpu.memory_space<vmem>>, vector<1x256xf32>
    %21 = vector.broadcast %20 : vector<1x256xf32> to vector<256x256xf32>
    %22 = arith.addf %19, %21 : vector<256x256xf32>
    %cst_16 = arith.constant 0.000000e+00 : f32
    %23 = vector.broadcast %cst_16 : f32 to vector<256x256xf32>
    %24 = arith.maximumf %22, %23 : vector<256x256xf32>
    %25 = arith.truncf %24 : vector<256x256xf32> to vector<256x256xbf16>
    %c0_17 = arith.constant 0 : index
    %c0_18 = arith.constant 0 : index
    %26 = vector.load %arg9[%c0_17, %c0_18] : memref<256x128xbf16, #tpu.memory_space<vmem>>, vector<256x128xbf16>
    %cst_19 = arith.constant dense<0.000000e+00> : vector<256x128xf32>
    %27 = tpu.matmul %25, %26, %cst_19 {dimension_numbers = #tpu.dot_dimension_numbers<[1], [0], [0], [1], [0, 0, 1, 1], [], []>} : vector<256x256xbf16>, vector<256x128xbf16>, vector<256x128xf32> -> vector<256x128xf32>
    %c0_20 = arith.constant 0 : index
    %c0_21 = arith.constant 0 : index
    %28 = vector.load %arg10[%c0_20, %c0_21] : memref<1x128xf32, #tpu.memory_space<vmem>>, vector<1x128xf32>
    %29 = vector.broadcast %28 : vector<1x128xf32> to vector<256x128xf32>
    %30 = arith.addf %27, %29 : vector<256x128xf32>
    %cst_22 = arith.constant 0.000000e+00 : f32
    %31 = vector.broadcast %cst_22 : f32 to vector<256x128xf32>
    %32 = arith.maximumf %30, %31 : vector<256x128xf32>
    %c0_23 = arith.constant 0 : index
    %c0_24 = arith.constant 0 : index
    %33 = vector.load %arg12[%c0_23, %c0_24] : memref<256x128xf32, #tpu.memory_space<vmem>>, vector<256x128xf32>
    tpu.vector_store %arg12[%c0_23, %c0_24], %32 {strides = array<i32>} : memref<256x128xf32, #tpu.memory_space<vmem>>, vector<256x128xf32>,
    %c0_25 = arith.constant 0 : index
    %c0_26 = arith.constant 0 : index
    %34 = vector.load %arg1[%c0_25, %c0_26] : memref<256x12xf32, #tpu.memory_space<vmem>>, vector<256x12xf32>
    %cst_27 = arith.constant 1.000000e-01 : f32
    %35 = vector.broadcast %cst_27 : f32 to vector<256x12xf32>
    %36 = arith.mulf %7, %35 : vector<256x12xf32>
    %37 = arith.addf %34, %36 : vector<256x12xf32>
    %c0_28 = arith.constant 0 : index
    %c0_29 = arith.constant 0 : index
    %38 = vector.load %arg11[%c0_28, %c0_29] : memref<256x12xf32, #tpu.memory_space<vmem>>, vector<256x12xf32>
    tpu.vector_store %arg11[%c0_28, %c0_29], %37 {strides = array<i32>} : memref<256x12xf32, #tpu.memory_space<vmem>>, vector<256x12xf32>,
    return
  }
  func.func @transform_0(%arg0: i32) -> (i32, i32) {
    %c0_i32 = arith.constant 0 : i32
    %c0_i32_0 = arith.constant 0 : i32
    return %arg0, %c0_i32 : i32, i32
  }
  func.func @transform_1(%arg0: i32) -> (i32, i32) {
    %c0_i32 = arith.constant 0 : i32
    %c0_i32_0 = arith.constant 0 : i32
    return %arg0, %c0_i32 : i32, i32
  }
  func.func @transform_2(%arg0: i32) -> (i32, i32) {
    %c0_i32 = arith.constant 0 : i32
    %c0_i32_0 = arith.constant 0 : i32
    %c0_i32_1 = arith.constant 0 : i32
    return %c0_i32, %c0_i32_0 : i32, i32
  }
  func.func @transform_3(%arg0: i32) -> (i32, i32) {
    %c0_i32 = arith.constant 0 : i32
    %c0_i32_0 = arith.constant 0 : i32
    %c0_i32_1 = arith.constant 0 : i32
    return %c0_i32, %c0_i32_0 : i32, i32
  }
  func.func @transform_4(%arg0: i32) -> (i32, i32) {
    %c0_i32 = arith.constant 0 : i32
    %c0_i32_0 = arith.constant 0 : i32
    %c0_i32_1 = arith.constant 0 : i32
    return %c0_i32, %c0_i32_0 : i32, i32
  }
  func.func @transform_5(%arg0: i32) -> (i32, i32) {
    %c0_i32 = arith.constant 0 : i32
    %c0_i32_0 = arith.constant 0 : i32
    %c0_i32_1 = arith.constant 0 : i32
    return %c0_i32, %c0_i32_0 : i32, i32
  }
  func.func @transform_6(%arg0: i32) -> (i32, i32) {
    %c0_i32 = arith.constant 0 : i32
    %c0_i32_0 = arith.constant 0 : i32
    %c0_i32_1 = arith.constant 0 : i32
    return %c0_i32, %c0_i32_0 : i32, i32
  }
  func.func @transform_7(%arg0: i32) -> (i32, i32) {
    %c0_i32 = arith.constant 0 : i32
    %c0_i32_0 = arith.constant 0 : i32
    %c0_i32_1 = arith.constant 0 : i32
    return %c0_i32, %c0_i32_0 : i32, i32
  }
  func.func @transform_8(%arg0: i32) -> (i32, i32) {
    %c0_i32 = arith.constant 0 : i32
    %c0_i32_0 = arith.constant 0 : i32
    %c0_i32_1 = arith.constant 0 : i32
    return %c0_i32, %c0_i32_0 : i32, i32
  }
  func.func @transform_9(%arg0: i32) -> (i32, i32) {
    %c0_i32 = arith.constant 0 : i32
    %c0_i32_0 = arith.constant 0 : i32
    %c0_i32_1 = arith.constant 0 : i32
    return %c0_i32, %c0_i32_0 : i32, i32
  }
  func.func @transform_10(%arg0: i32) -> (i32, i32) {
    %c0_i32 = arith.constant 0 : i32
    %c0_i32_0 = arith.constant 0 : i32
    return %arg0, %c0_i32 : i32, i32
  }
  func.func @transform_11(%arg0: i32) -> (i32, i32) {
    %c0_i32 = arith.constant 0 : i32
    %c0_i32_0 = arith.constant 0 : i32
    return %arg0, %c0_i32 : i32, i32
  }
}

</mosaic_0001>

<llo_original>
// kernel: tile.9
$region0: #{tile.9}
  %s0 = inlined_call_operand.vmem [shape: f32[2000,4,3], index: 0, kind: input, shape index: {}]
  %s1 = inlined_call_operand.vmem [shape: f32[2000,12], index: 1, kind: output, shape index: {}]
  $region1: #{tile.9} parent=0
    #allocation0 [shape = 'u8[262144]{0}', space=vmem, size = 0x40000, scoped, tag = 'scoped mem for input reshape']
    %s3 = sshllo.u32 0, 4
    %s4 = smul.addr 4, 63
    %s5 = scalar_lea.vmem %s0, %s4
    %v6 = vld [vmem:[%s5] sm:%s3]
    %s7 = scalar_lea.vmem [#allocation0], 504
    %8 = vst [vmem:[%s7] sm:%s3] %v6
    %s9 = smul.addr 4, 62
    %s10 = scalar_lea.vmem %s0, %s9
    %v11 = vld [vmem:[%s10] sm:%s3]
    %s12 = scalar_lea.vmem [#allocation0], 496
    %13 = vst [vmem:[%s12] sm:%s3] %v11
    %s14 = smul.addr 4, 61
    %s15 = scalar_lea.vmem %s0, %s14
    %v16 = vld [vmem:[%s15] sm:%s3]
    %s17 = scalar_lea.vmem [#allocation0], 488
    %18 = vst [vmem:[%s17] sm:%s3] %v16
    %s19 = smul.addr 4, 60
    %s20 = scalar_lea.vmem %s0, %s19
    %v21 = vld [vmem:[%s20] sm:%s3]
    %s22 = scalar_lea.vmem [#allocation0], 480
    %23 = vst [vmem:[%s22] sm:%s3] %v21
    %s24 = smul.addr 4, 59
    %s25 = scalar_lea.vmem %s0, %s24
    %v26 = vld [vmem:[%s25] sm:%s3]
    %s27 = scalar_lea.vmem [#allocation0], 472
    %28 = vst [vmem:[%s27] sm:%s3] %v26
    %s29 = smul.addr 4, 58
    %s30 = scalar_lea.vmem %s0, %s29
    %v31 = vld [vmem:[%s30] sm:%s3]
    %s32 = scalar_lea.vmem [#allocation0], 464
    %33 = vst [vmem:[%s32] sm:%s3] %v31
    %s34 = smul.addr 4, 57
    %s35 = scalar_lea.vmem %s0, %s34
    %v36 = vld [vmem:[%s35] sm:%s3]
    %s37 = scalar_lea.vmem [#allocation0], 456
    %38 = vst [vmem:[%s37] sm:%s3] %v36
    %s39 = smul.addr 4, 56
    %s40 = scalar_lea.vmem %s0, %s39
    %v41 = vld [vmem:[%s40] sm:%s3]
    %s42 = scalar_lea.vmem [#allocation0], 448
    %43 = vst [vmem:[%s42] sm:%s3] %v41
    %s44 = smul.addr 4, 55
    %s45 = scalar_lea.vmem %s0, %s44
    %v46 = vld [vmem:[%s45] sm:%s3]
    %s47 = scalar_lea.vmem [#allocation0], 440
    %48 = vst [vmem:[%s47] sm:%s3] %v46
    %s49 = smul.addr 4, 54
    %s50 = scalar_lea.vmem %s0, %s49
    %v51 = vld [vmem:[%s50] sm:%s3]
    %s52 = scalar_lea.vmem [#allocation0], 432
    %53 = vst [vmem:[%s52] sm:%s3] %v51
    %s54 = smul.addr 4, 53
    %s55 = scalar_lea.vmem %s0, %s54
    %v56 = vld [vmem:[%s55] sm:%s3]
    %s57 = scalar_lea.vmem [#allocation0], 424
    %58 = vst [vmem:[%s57] sm:%s3] %v56
    %s59 = smul.addr 4, 52
    %s60 = scalar_lea.vmem %s0, %s59
    %v61 = vld [vmem:[%s60] sm:%s3]
    %s62 = scalar_lea.vmem [#allocation0], 416
    %63 = vst [vmem:[%s62] sm:%s3] %v61
    %s64 = smul.addr 4, 51
    %s65 = scalar_lea.vmem %s0, %s64
    %v66 = vld [vmem:[%s65] sm:%s3]
    %s67 = scalar_lea.vmem [#allocation0], 408
    %68 = vst [vmem:[%s67] sm:%s3] %v66
    %s69 = smul.addr 4, 50
    %s70 = scalar_lea.vmem %s0, %s69
    %v71 = vld [vmem:[%s70] sm:%s3]
    %s72 = scalar_lea.vmem [#allocation0], 400
    %73 = vst [vmem:[%s72] sm:%s3] %v71
    %s74 = smul.addr 4, 49
    %s75 = scalar_lea.vmem %s0, %s74
    %v76 = vld [vmem:[%s75] sm:%s3]
    %s77 = scalar_lea.vmem [#allocation0], 392
    %78 = vst [vmem:[%s77] sm:%s3] %v76
    %s79 = smul.addr 4, 48
    %s80 = scalar_lea.vmem %s0, %s79
    %v81 = vld [vmem:[%s80] sm:%s3]
    %s82 = scalar_lea.vmem [#allocation0], 384
    %83 = vst [vmem:[%s82] sm:%s3] %v81
    %s84 = smul.addr 4, 47
    %s85 = scalar_lea.vmem %s0, %s84
    %v86 = vld [vmem:[%s85] sm:%s3]
    %s87 = scalar_lea.vmem [#allocation0], 376
    %88 = vst [vmem:[%s87] sm:%s3] %v86
    %s89 = smul.addr 4, 46
    %s90 = scalar_lea.vmem %s0, %s89
    %v91 = vld [vmem:[%s90] sm:%s3]
    %s92 = scalar_lea.vmem [#allocation0], 368
    %93 = vst [vmem:[%s92] sm:%s3] %v91
    %s94 = smul.addr 4, 45
    %s95 = scalar_lea.vmem %s0, %s94
    %v96 = vld [vmem:[%s95] sm:%s3]
    %s97 = scalar_lea.vmem [#allocation0], 360
    %98 = vst [vmem:[%s97] sm:%s3] %v96
    %s99 = smul.addr 4, 44
    %s100 = scalar_lea.vmem %s0, %s99
    %v101 = vld [vmem:[%s100] sm:%s3]
    %s102 = scalar_lea.vmem [#allocation0], 352
    %103 = vst [vmem:[%s102] sm:%s3] %v101
    %s104 = smul.addr 4, 43
    %s105 = scalar_lea.vmem %s0, %s104
    %v106 = vld [vmem:[%s105] sm:%s3]
    %s107 = scalar_lea.vmem [#allocation0], 344
    %108 = vst [vmem:[%s107] sm:%s3] %v106
    %s109 = smul.addr 4, 42
    %s110 = scalar_lea.vmem %s0, %s109
    %v111 = vld [vmem:[%s110] sm:%s3]
    %s112 = scalar_lea.vmem [#allocation0], 336
    %113 = vst [vmem:[%s112] sm:%s3] %v111
    %s114 = smul.addr 4, 41
    %s115 = scalar_lea.vmem %s0, %s114
    %v116 = vld [vmem:[%s115] sm:%s3]
    %s117 = scalar_lea.vmem [#allocation0], 328
    %118 = vst [vmem:[%s117] sm:%s3] %v116
    %s119 = smul.addr 4, 40
    %s120 = scalar_lea.vmem %s0, %s119
    %v121 = vld [vmem:[%s120] sm:%s3]
    %s122 = scalar_lea.vmem [#allocation0], 320
    %123 = vst [vmem:[%s122] sm:%s3] %v121
    %s124 = smul.addr 4, 39
    %s125 = scalar_lea.vmem %s0, %s124
    %v126 = vld [vmem:[%s125] sm:%s3]
    %s127 = scalar_lea.vmem [#allocation0], 312
    %128 = vst [vmem:[%s127] sm:%s3] %v126
    %s129 = smul.addr 4, 38
    %s130 = scalar_lea.vmem %s0, %s129
    %v131 = vld [vmem:[%s130] sm:%s3]
    %s132 = scalar_lea.vmem [#allocation0], 304
    %133 = vst [vmem:[%s132] sm:%s3] %v131
    %s134 = smul.addr 4, 37
    %s135 = scalar_lea.vmem %s0, %s134
    %v136 = vld [vmem:[%s135] sm:%s3]
    %s137 = scalar_lea.vmem [#allocation0], 296
    %138 = vst [vmem:[%s137] sm:%s3] %v136
    %s139 = smul.addr 4, 36
    %s140 = scalar_lea.vmem %s0, %s139
    %v141 = vld [vmem:[%s140] sm:%s3]
    %s142 = scalar_lea.vmem [#allocation0], 288
    %143 = vst [vmem:[%s142] sm:%s3] %v141
    %s144 = smul.addr 4, 35
    %s145 = scalar_lea.vmem %s0, %s144
    %v146 = vld [vmem:[%s145] sm:%s3]
    %s147 = scalar_lea.vmem [#allocation0], 280
    %148 = vst [vmem:[%s147] sm:%s3] %v146
    %s149 = smul.addr 4, 34
    %s150 = scalar_lea.vmem %s0, %s149
    %v151 = vld [vmem:[%s150] sm:%s3]
    %s152 = scalar_lea.vmem [#allocation0], 272
    %153 = vst [vmem:[%s152] sm:%s3] %v151
    %s154 = smul.addr 4, 33
    %s155 = scalar_lea.vmem %s0, %s154
    %v156 = vld [vmem:[%s155] sm:%s3]
    %s157 = scalar_lea.vmem [#allocation0], 264
    %158 = vst [vmem:[%s157] sm:%s3] %v156
    %s159 = smul.addr 4, 32
    %s160 = scalar_lea.vmem %s0, %s159
    %v161 = vld [vmem:[%s160] sm:%s3]
    %s162 = scalar_lea.vmem [#allocation0], 256
    %163 = vst [vmem:[%s162] sm:%s3] %v161
    %s164 = smul.addr 4, 31
    %s165 = scalar_lea.vmem %s0, %s164
    %v166 = vld [vmem:[%s165] sm:%s3]
    %s167 = scalar_lea.vmem [#allocation0], 248
    %168 = vst [vmem:[%s167] sm:%s3] %v166
    %s169 = smul.addr 4, 30
    %s170 = scalar_lea.vmem %s0, %s169
    %v171 = vld [vmem:[%s170] sm:%s3]
    %s172 = scalar_lea.vmem [#allocation0], 240
    %173 = vst [vmem:[%s172] sm:%s3] %v171
    %s174 = smul.addr 4, 29
    %s175 = scalar_lea.vmem %s0, %s174
    %v176 = vld [vmem:[%s175] sm:%s3]
    %s177 = scalar_lea.vmem [#allocation0], 232
    %178 = vst [vmem:[%s177] sm:%s3] %v176
    %s179 = smul.addr 4, 28
    %s180 = scalar_lea.vmem %s0, %s179
    %v181 = vld [vmem:[%s180] sm:%s3]
    %s182 = scalar_lea.vmem [#allocation0], 224
    %183 = vst [vmem:[%s182] sm:%s3] %v181
    %s184 = smul.addr 4, 27
    %s185 = scalar_lea.vmem %s0, %s184
    %v186 = vld [vmem:[%s185] sm:%s3]
    %s187 = scalar_lea.vmem [#allocation0], 216
    %188 = vst [vmem:[%s187] sm:%s3] %v186
    %s189 = smul.addr 4, 26
    %s190 = scalar_lea.vmem %s0, %s189
    %v191 = vld [vmem:[%s190] sm:%s3]
    %s192 = scalar_lea.vmem [#allocation0], 208
    %193 = vst [vmem:[%s192] sm:%s3] %v191
    %s194 = smul.addr 4, 25
    %s195 = scalar_lea.vmem %s0, %s194
    %v196 = vld [vmem:[%s195] sm:%s3]
    %s197 = scalar_lea.vmem [#allocation0], 200
    %198 = vst [vmem:[%s197] sm:%s3] %v196
    %s199 = smul.addr 4, 24
    %s200 = scalar_lea.vmem %s0, %s199
    %v201 = vld [vmem:[%s200] sm:%s3]
    %s202 = scalar_lea.vmem [#allocation0], 192
    %203 = vst [vmem:[%s202] sm:%s3] %v201
    %s204 = smul.addr 4, 23
    %s205 = scalar_lea.vmem %s0, %s204
    %v206 = vld [vmem:[%s205] sm:%s3]
    %s207 = scalar_lea.vmem [#allocation0], 184
    %208 = vst [vmem:[%s207] sm:%s3] %v206
    %s209 = smul.addr 4, 22
    %s210 = scalar_lea.vmem %s0, %s209
    %v211 = vld [vmem:[%s210] sm:%s3]
    %s212 = scalar_lea.vmem [#allocation0], 176
    %213 = vst [vmem:[%s212] sm:%s3] %v211
    %s214 = smul.addr 4, 21
    %s215 = scalar_lea.vmem %s0, %s214
    %v216 = vld [vmem:[%s215] sm:%s3]
    %s217 = scalar_lea.vmem [#allocation0], 168
    %218 = vst [vmem:[%s217] sm:%s3] %v216
    %s219 = smul.addr 4, 20
    %s220 = scalar_lea.vmem %s0, %s219
    %v221 = vld [vmem:[%s220] sm:%s3]
    %s222 = scalar_lea.vmem [#allocation0], 160
    %223 = vst [vmem:[%s222] sm:%s3] %v221
    %s224 = smul.addr 4, 19
    %s225 = scalar_lea.vmem %s0, %s224
    %v226 = vld [vmem:[%s225] sm:%s3]
    %s227 = scalar_lea.vmem [#allocation0], 152
    %228 = vst [vmem:[%s227] sm:%s3] %v226
    %s229 = smul.addr 4, 18
    %s230 = scalar_lea.vmem %s0, %s229
    %v231 = vld [vmem:[%s230] sm:%s3]
    %s232 = scalar_lea.vmem [#allocation0], 144
    %233 = vst [vmem:[%s232] sm:%s3] %v231
    %s234 = smul.addr 4, 17
    %s235 = scalar_lea.vmem %s0, %s234
    %v236 = vld [vmem:[%s235] sm:%s3]
    %s237 = scalar_lea.vmem [#allocation0], 136
    %238 = vst [vmem:[%s237] sm:%s3] %v236
    %s239 = smul.addr 4, 16
    %s240 = scalar_lea.vmem %s0, %s239
    %v241 = vld [vmem:[%s240] sm:%s3]
    %s242 = scalar_lea.vmem [#allocation0], 128
    %243 = vst [vmem:[%s242] sm:%s3] %v241
    %s244 = smul.addr 4, 15
    %s245 = scalar_lea.vmem %s0, %s244
    %v246 = vld [vmem:[%s245] sm:%s3]
    %s247 = scalar_lea.vmem [#allocation0], 120
    %248 = vst [vmem:[%s247] sm:%s3] %v246
    %s249 = smul.addr 4, 14
    %s250 = scalar_lea.vmem %s0, %s249
    %v251 = vld [vmem:[%s250] sm:%s3]
    %s252 = scalar_lea.vmem [#allocation0], 112
    %253 = vst [vmem:[%s252] sm:%s3] %v251
    %s254 = smul.addr 4, 13
    %s255 = scalar_lea.vmem %s0, %s254
    %v256 = vld [vmem:[%s255] sm:%s3]
    %s257 = scalar_lea.vmem [#allocation0], 104
    %258 = vst [vmem:[%s257] sm:%s3] %v256
    %s259 = smul.addr 4, 12
    %s260 = scalar_lea.vmem %s0, %s259
    %v261 = vld [vmem:[%s260] sm:%s3]
    %s262 = scalar_lea.vmem [#allocation0], 96
    %263 = vst [vmem:[%s262] sm:%s3] %v261
    %s264 = smul.addr 4, 11
    %s265 = scalar_lea.vmem %s0, %s264
    %v266 = vld [vmem:[%s265] sm:%s3]
    %s267 = scalar_lea.vmem [#allocation0], 88
    %268 = vst [vmem:[%s267] sm:%s3] %v266
    %s269 = smul.addr 4, 10
    %s270 = scalar_lea.vmem %s0, %s269
    %v271 = vld [vmem:[%s270] sm:%s3]
    %s272 = scalar_lea.vmem [#allocation0], 80
    %273 = vst [vmem:[%s272] sm:%s3] %v271
    %s274 = smul.addr 4, 9
    %s275 = scalar_lea.vmem %s0, %s274
    %v276 = vld [vmem:[%s275] sm:%s3]
    %s277 = scalar_lea.vmem [#allocation0], 72
    %278 = vst [vmem:[%s277] sm:%s3] %v276
    %s279 = smul.addr 4, 8
    %s280 = scalar_lea.vmem %s0, %s279
    %v281 = vld [vmem:[%s280] sm:%s3]
    %s282 = scalar_lea.vmem [#allocation0], 64
    %283 = vst [vmem:[%s282] sm:%s3] %v281
    %s284 = smul.addr 4, 7
    %s285 = scalar_lea.vmem %s0, %s284
    %v286 = vld [vmem:[%s285] sm:%s3]
    %s287 = scalar_lea.vmem [#allocation0], 56
    %288 = vst [vmem:[%s287] sm:%s3] %v286
    %s289 = smul.addr 4, 6
    %s290 = scalar_lea.vmem %s0, %s289
    %v291 = vld [vmem:[%s290] sm:%s3]
    %s292 = scalar_lea.vmem [#allocation0], 48
    %293 = vst [vmem:[%s292] sm:%s3] %v291
    %s294 = smul.addr 4, 5
    %s295 = scalar_lea.vmem %s0, %s294
    %v296 = vld [vmem:[%s295] sm:%s3]
    %s297 = scalar_lea.vmem [#allocation0], 40
    %298 = vst [vmem:[%s297] sm:%s3] %v296
    %s299 = smul.addr 4, 4
    %s300 = scalar_lea.vmem %s0, %s299
    %v301 = vld [vmem:[%s300] sm:%s3]
    %s302 = scalar_lea.vmem [#allocation0], 32
    %303 = vst [vmem:[%s302] sm:%s3] %v301
    %s304 = smul.addr 4, 3
    %s305 = scalar_lea.vmem %s0, %s304
    %v306 = vld [vmem:[%s305] sm:%s3]
    %s307 = scalar_lea.vmem [#allocation0], 24
    %308 = vst [vmem:[%s307] sm:%s3] %v306
    %s309 = smul.addr 4, 2
    %s310 = scalar_lea.vmem %s0, %s309
    %v311 = vld [vmem:[%s310] sm:%s3]
    %s312 = scalar_lea.vmem [#allocation0], 16
    %313 = vst [vmem:[%s312] sm:%s3] %v311
    %s314 = scalar_lea.vmem %s0, 4
    %v315 = vld [vmem:[%s314] sm:%s3]
    %s316 = scalar_lea.vmem [#allocation0], 8
    %317 = vst [vmem:[%s316] sm:%s3] %v315
    %v318 = vld [vmem:[%s0] sm:%s3]
    %319 = vst [vmem:[#allocation0] sm:%s3] %v318
    %s320 = scalar_lea.vmem [#allocation0], 120
    %v321 = vld [vmem:[%s320] sm:$0x7]
    %vm322 = vcmask 654336
    %s323 = scalar_lea.vmem %s1, 120
    %324 = vst.msk [vmem:[%s323] sm:$0x7] %vm322, %v321
    %s325 = scalar_lea.vmem [#allocation0], 248
    %v326 = vld [vmem:[%s325] sm:$0x7]
    %vm327 = vcmask 654336
    %s328 = scalar_lea.vmem %s1, 123
    %329 = vst.msk [vmem:[%s328] sm:$0x7] %vm327, %v326
    %s330 = scalar_lea.vmem [#allocation0], 376
    %v331 = vld [vmem:[%s330] sm:$0x7]
    %vm332 = vcmask 654336
    %s333 = scalar_lea.vmem %s1, 126
    %334 = vst.msk [vmem:[%s333] sm:$0x3] %vm332, %v331
    %s335 = scalar_lea.vmem %s1, 246
    %336 = vst.msk [vmem:[%s335] sm:$0x4] %vm332, %v331
    %s337 = scalar_lea.vmem [#allocation0], 504
    %v338 = vld [vmem:[%s337] sm:$0x7]
    %vm339 = vcmask 654336
    %s340 = scalar_lea.vmem %s1, 249
    %341 = vst.msk [vmem:[%s340] sm:$0x7] %vm339, %v338
    %v342 = vld [vmem:[#allocation0] sm:$0x7]
    %343 = vst [vmem:[%s1] sm:$0x7] %v342
    %s344 = scalar_lea.vmem [#allocation0], 8
    %v345 = vld [vmem:[%s344] sm:$0x7]
    %s346 = scalar_lea.vmem %s1, 8
    %347 = vst [vmem:[%s346] sm:$0x7] %v345
    %s348 = scalar_lea.vmem [#allocation0], 16
    %v349 = vld [vmem:[%s348] sm:$0x7]
    %s350 = scalar_lea.vmem %s1, 16
    %351 = vst [vmem:[%s350] sm:$0x7] %v349
    %s352 = scalar_lea.vmem [#allocation0], 24
    %v353 = vld [vmem:[%s352] sm:$0x7]
    %s354 = scalar_lea.vmem %s1, 24
    %355 = vst [vmem:[%s354] sm:$0x7] %v353
    %s356 = scalar_lea.vmem [#allocation0], 32
    %v357 = vld [vmem:[%s356] sm:$0x7]
    %s358 = scalar_lea.vmem %s1, 32
    %359 = vst [vmem:[%s358] sm:$0x7] %v357
    %s360 = scalar_lea.vmem [#allocation0], 40
    %v361 = vld [vmem:[%s360] sm:$0x7]
    %s362 = scalar_lea.vmem %s1, 40
    %363 = vst [vmem:[%s362] sm:$0x7] %v361
    %s364 = scalar_lea.vmem [#allocation0], 48
    %v365 = vld [vmem:[%s364] sm:$0x7]
    %s366 = scalar_lea.vmem %s1, 48
    %367 = vst [vmem:[%s366] sm:$0x7] %v365
    %s368 = scalar_lea.vmem [#allocation0], 56
    %v369 = vld [vmem:[%s368] sm:$0x7]
    %s370 = scalar_lea.vmem %s1, 56
    %371 = vst [vmem:[%s370] sm:$0x7] %v369
    %s372 = scalar_lea.vmem [#allocation0], 64
    %v373 = vld [vmem:[%s372] sm:$0x7]
    %s374 = scalar_lea.vmem %s1, 64
    %375 = vst [vmem:[%s374] sm:$0x7] %v373
    %s376 = scalar_lea.vmem [#allocation0], 72
    %v377 = vld [vmem:[%s376] sm:$0x7]
    %s378 = scalar_lea.vmem %s1, 72
    %379 = vst [vmem:[%s378] sm:$0x7] %v377
    %s380 = scalar_lea.vmem [#allocation0], 80
    %v381 = vld [vmem:[%s380] sm:$0x7]
    %s382 = scalar_lea.vmem %s1, 80
    %383 = vst [vmem:[%s382] sm:$0x7] %v381
    %s384 = scalar_lea.vmem [#allocation0], 88
    %v385 = vld [vmem:[%s384] sm:$0x7]
    %s386 = scalar_lea.vmem %s1, 88
    %387 = vst [vmem:[%s386] sm:$0x7] %v385
    %s388 = scalar_lea.vmem [#allocation0], 96
    %v389 = vld [vmem:[%s388] sm:$0x7]
    %s390 = scalar_lea.vmem %s1, 96
    %391 = vst [vmem:[%s390] sm:$0x7] %v389
    %s392 = scalar_lea.vmem [#allocation0], 104
    %v393 = vld [vmem:[%s392] sm:$0x7]
    %s394 = scalar_lea.vmem %s1, 104
    %395 = vst [vmem:[%s394] sm:$0x7] %v393
    %s396 = scalar_lea.vmem [#allocation0], 112
    %v397 = vld [vmem:[%s396] sm:$0x7]
    %s398 = scalar_lea.vmem %s1, 112
    %399 = vst [vmem:[%s398] sm:$0x7] %v397
    %s400 = scalar_lea.vmem [#allocation0], 128
    %v401 = vld [vmem:[%s400] sm:$0x7]
    %s402 = scalar_lea.vmem %s1, 3
    %403 = vst [vmem:[%s402] sm:$0x7] %v401
    %s404 = scalar_lea.vmem [#allocation0], 136
    %v405 = vld [vmem:[%s404] sm:$0x7]
    %s406 = scalar_lea.vmem %s1, 11
    %407 = vst [vmem:[%s406] sm:$0x7] %v405
    %s408 = scalar_lea.vmem [#allocation0], 144
    %v409 = vld [vmem:[%s408] sm:$0x7]
    %s410 = scalar_lea.vmem %s1, 19
    %411 = vst [vmem:[%s410] sm:$0x7] %v409
    %s412 = scalar_lea.vmem [#allocation0], 152
    %v413 = vld [vmem:[%s412] sm:$0x7]
    %s414 = scalar_lea.vmem %s1, 27
    %415 = vst [vmem:[%s414] sm:$0x7] %v413
    %s416 = scalar_lea.vmem [#allocation0], 160
    %v417 = vld [vmem:[%s416] sm:$0x7]
    %s418 = scalar_lea.vmem %s1, 35
    %419 = vst [vmem:[%s418] sm:$0x7] %v417
    %s420 = scalar_lea.vmem [#allocation0], 168
    %v421 = vld [vmem:[%s420] sm:$0x7]
    %s422 = scalar_lea.vmem %s1, 43
    %423 = vst [vmem:[%s422] sm:$0x7] %v421
    %s424 = scalar_lea.vmem [#allocation0], 176
    %v425 = vld [vmem:[%s424] sm:$0x7]
    %s426 = scalar_lea.vmem %s1, 51
    %427 = vst [vmem:[%s426] sm:$0x7] %v425
    %s428 = scalar_lea.vmem [#allocation0], 184
    %v429 = vld [vmem:[%s428] sm:$0x7]
    %s430 = scalar_lea.vmem %s1, 59
    %431 = vst [vmem:[%s430] sm:$0x7] %v429
    %s432 = scalar_lea.vmem [#allocation0], 192
    %v433 = vld [vmem:[%s432] sm:$0x7]
    %s434 = scalar_lea.vmem %s1, 67
    %435 = vst [vmem:[%s434] sm:$0x7] %v433
    %s436 = scalar_lea.vmem [#allocation0], 200
    %v437 = vld [vmem:[%s436] sm:$0x7]
    %s438 = scalar_lea.vmem %s1, 75
    %439 = vst [vmem:[%s438] sm:$0x7] %v437
    %s440 = scalar_lea.vmem [#allocation0], 208
    %v441 = vld [vmem:[%s440] sm:$0x7]
    %s442 = scalar_lea.vmem %s1, 83
    %443 = vst [vmem:[%s442] sm:$0x7] %v441
    %s444 = scalar_lea.vmem [#allocation0], 216
    %v445 = vld [vmem:[%s444] sm:$0x7]
    %s446 = scalar_lea.vmem %s1, 91
    %447 = vst [vmem:[%s446] sm:$0x7] %v445
    %s448 = scalar_lea.vmem [#allocation0], 224
    %v449 = vld [vmem:[%s448] sm:$0x7]
    %s450 = scalar_lea.vmem %s1, 99
    %451 = vst [vmem:[%s450] sm:$0x7] %v449
    %s452 = scalar_lea.vmem [#allocation0], 232
    %v453 = vld [vmem:[%s452] sm:$0x7]
    %s454 = scalar_lea.vmem %s1, 107
    %455 = vst [vmem:[%s454] sm:$0x7] %v453
    %s456 = scalar_lea.vmem [#allocation0], 240
    %v457 = vld [vmem:[%s456] sm:$0x7]
    %s458 = scalar_lea.vmem %s1, 115
    %459 = vst [vmem:[%s458] sm:$0x7] %v457
    %s460 = scalar_lea.vmem [#allocation0], 256
    %v461 = vld [vmem:[%s460] sm:$0x7]
    %s462 = scalar_lea.vmem %s1, 6
    %463 = vst [vmem:[%s462] sm:$0x3] %v461
    %s464 = scalar_lea.vmem %s1, 126
    %465 = vst [vmem:[%s464] sm:$0x4] %v461
    %s466 = scalar_lea.vmem [#allocation0], 264
    %v467 = vld [vmem:[%s466] sm:$0x7]
    %s468 = scalar_lea.vmem %s1, 14
    %469 = vst [vmem:[%s468] sm:$0x3] %v467
    %s470 = scalar_lea.vmem %s1, 134
    %471 = vst [vmem:[%s470] sm:$0x4] %v467
    %s472 = scalar_lea.vmem [#allocation0], 272
    %v473 = vld [vmem:[%s472] sm:$0x7]
    %s474 = scalar_lea.vmem %s1, 22
    %475 = vst [vmem:[%s474] sm:$0x3] %v473
    %s476 = scalar_lea.vmem %s1, 142
    %477 = vst [vmem:[%s476] sm:$0x4] %v473
    %s478 = scalar_lea.vmem [#allocation0], 280
    %v479 = vld [vmem:[%s478] sm:$0x7]
    %s480 = scalar_lea.vmem %s1, 30
    %481 = vst [vmem:[%s480] sm:$0x3] %v479
    %s482 = scalar_lea.vmem %s1, 150
    %483 = vst [vmem:[%s482] sm:$0x4] %v479
    %s484 = scalar_lea.vmem [#allocation0], 288
    %v485 = vld [vmem:[%s484] sm:$0x7]
    %s486 = scalar_lea.vmem %s1, 38
    %487 = vst [vmem:[%s486] sm:$0x3] %v485
    %s488 = scalar_lea.vmem %s1, 158
    %489 = vst [vmem:[%s488] sm:$0x4] %v485
    %s490 = scalar_lea.vmem [#allocation0], 296
    %v491 = vld [vmem:[%s490] sm:$0x7]
    %s492 = scalar_lea.vmem %s1, 46
    %493 = vst [vmem:[%s492] sm:$0x3] %v491
    %s494 = scalar_lea.vmem %s1, 166
    %495 = vst [vmem:[%s494] sm:$0x4] %v491
    %s496 = scalar_lea.vmem [#allocation0], 304
    %v497 = vld [vmem:[%s496] sm:$0x7]
    %s498 = scalar_lea.vmem %s1, 54
    %499 = vst [vmem:[%s498] sm:$0x3] %v497
    %s500 = scalar_lea.vmem %s1, 174
    %501 = vst [vmem:[%s500] sm:$0x4] %v497
    %s502 = scalar_lea.vmem [#allocation0], 312
    %v503 = vld [vmem:[%s502] sm:$0x7]
    %s504 = scalar_lea.vmem %s1, 62
    %505 = vst [vmem:[%s504] sm:$0x3] %v503
    %s506 = scalar_lea.vmem %s1, 182
    %507 = vst [vmem:[%s506] sm:$0x4] %v503
    %s508 = scalar_lea.vmem [#allocation0], 320
    %v509 = vld [vmem:[%s508] sm:$0x7]
    %s510 = scalar_lea.vmem %s1, 70
    %511 = vst [vmem:[%s510] sm:$0x3] %v509
    %s512 = scalar_lea.vmem %s1, 190
    %513 = vst [vmem:[%s512] sm:$0x4] %v509
    %s514 = scalar_lea.vmem [#allocation0], 328
    %v515 = vld [vmem:[%s514] sm:$0x7]
    %s516 = scalar_lea.vmem %s1, 78
    %517 = vst [vmem:[%s516] sm:$0x3] %v515
    %s518 = scalar_lea.vmem %s1, 198
    %519 = vst [vmem:[%s518] sm:$0x4] %v515
    %s520 = scalar_lea.vmem [#allocation0], 336
    %v521 = vld [vmem:[%s520] sm:$0x7]
    %s522 = scalar_lea.vmem %s1, 86
    %523 = vst [vmem:[%s522] sm:$0x3] %v521
    %s524 = scalar_lea.vmem %s1, 206
    %525 = vst [vmem:[%s524] sm:$0x4] %v521
    %s526 = scalar_lea.vmem [#allocation0], 344
    %v527 = vld [vmem:[%s526] sm:$0x7]
    %s528 = scalar_lea.vmem %s1, 94
    %529 = vst [vmem:[%s528] sm:$0x3] %v527
    %s530 = scalar_lea.vmem %s1, 214
    %531 = vst [vmem:[%s530] sm:$0x4] %v527
    %s532 = scalar_lea.vmem [#allocation0], 352
    %v533 = vld [vmem:[%s532] sm:$0x7]
    %s534 = scalar_lea.vmem %s1, 102
    %535 = vst [vmem:[%s534] sm:$0x3] %v533
    %s536 = scalar_lea.vmem %s1, 222
    %537 = vst [vmem:[%s536] sm:$0x4] %v533
    %s538 = scalar_lea.vmem [#allocation0], 360
    %v539 = vld [vmem:[%s538] sm:$0x7]
    %s540 = scalar_lea.vmem %s1, 110
    %541 = vst [vmem:[%s540] sm:$0x3] %v539
    %s542 = scalar_lea.vmem %s1, 230
    %543 = vst [vmem:[%s542] sm:$0x4] %v539
    %s544 = scalar_lea.vmem [#allocation0], 368
    %v545 = vld [vmem:[%s544] sm:$0x7]
    %s546 = scalar_lea.vmem %s1, 118
    %547 = vst [vmem:[%s546] sm:$0x3] %v545
    %s548 = scalar_lea.vmem %s1, 238
    %549 = vst [vmem:[%s548] sm:$0x4] %v545
    %s550 = scalar_lea.vmem [#allocation0], 384
    %v551 = vld [vmem:[%s550] sm:$0x7]
    %s552 = scalar_lea.vmem %s1, 129
    %553 = vst [vmem:[%s552] sm:$0x7] %v551
    %s554 = scalar_lea.vmem [#allocation0], 392
    %v555 = vld [vmem:[%s554] sm:$0x7]
    %s556 = scalar_lea.vmem %s1, 137
    %557 = vst [vmem:[%s556] sm:$0x7] %v555
    %s558 = scalar_lea.vmem [#allocation0], 400
    %v559 = vld [vmem:[%s558] sm:$0x7]
    %s560 = scalar_lea.vmem %s1, 145
    %561 = vst [vmem:[%s560] sm:$0x7] %v559
    %s562 = scalar_lea.vmem [#allocation0], 408
    %v563 = vld [vmem:[%s562] sm:$0x7]
    %s564 = scalar_lea.vmem %s1, 153
    %565 = vst [vmem:[%s564] sm:$0x7] %v563
    %s566 = scalar_lea.vmem [#allocation0], 416
    %v567 = vld [vmem:[%s566] sm:$0x7]
    %s568 = scalar_lea.vmem %s1, 161
    %569 = vst [vmem:[%s568] sm:$0x7] %v567
    %s570 = scalar_lea.vmem [#allocation0], 424
    %v571 = vld [vmem:[%s570] sm:$0x7]
    %s572 = scalar_lea.vmem %s1, 169
    %573 = vst [vmem:[%s572] sm:$0x7] %v571
    %s574 = scalar_lea.vmem [#allocation0], 432
    %v575 = vld [vmem:[%s574] sm:$0x7]
    %s576 = scalar_lea.vmem %s1, 177
    %577 = vst [vmem:[%s576] sm:$0x7] %v575
    %s578 = scalar_lea.vmem [#allocation0], 440
    %v579 = vld [vmem:[%s578] sm:$0x7]
    %s580 = scalar_lea.vmem %s1, 185
    %581 = vst [vmem:[%s580] sm:$0x7] %v579
    %s582 = scalar_lea.vmem [#allocation0], 448
    %v583 = vld [vmem:[%s582] sm:$0x7]
    %s584 = scalar_lea.vmem %s1, 193
    %585 = vst [vmem:[%s584] sm:$0x7] %v583
    %s586 = scalar_lea.vmem [#allocation0], 456
    %v587 = vld [vmem:[%s586] sm:$0x7]
    %s588 = scalar_lea.vmem %s1, 201
    %589 = vst [vmem:[%s588] sm:$0x7] %v587
    %s590 = scalar_lea.vmem [#allocation0], 464
    %v591 = vld [vmem:[%s590] sm:$0x7]
    %s592 = scalar_lea.vmem %s1, 209
    %593 = vst [vmem:[%s592] sm:$0x7] %v591
    %s594 = scalar_lea.vmem [#allocation0], 472
    %v595 = vld [vmem:[%s594] sm:$0x7]
    %s596 = scalar_lea.vmem %s1, 217
    %597 = vst [vmem:[%s596] sm:$0x7] %v595
    %s598 = scalar_lea.vmem [#allocation0], 480
    %v599 = vld [vmem:[%s598] sm:$0x7]
    %s600 = scalar_lea.vmem %s1, 225
    %601 = vst [vmem:[%s600] sm:$0x7] %v599
    %s602 = scalar_lea.vmem [#allocation0], 488
    %v603 = vld [vmem:[%s602] sm:$0x7]
    %s604 = scalar_lea.vmem %s1, 233
    %605 = vst [vmem:[%s604] sm:$0x7] %v603
    %s606 = scalar_lea.vmem [#allocation0], 496
    %v607 = vld [vmem:[%s606] sm:$0x7]
    %s608 = scalar_lea.vmem %s1, 241
    %609 = vst [vmem:[%s608] sm:$0x7] %v607

// kernel: middle_decoder_forward.1
$region0: #{middle_decoder_forward.1}
  #allocation0 [shape = 'u32[]', space=smem, size = 0x4, offset = 0x4, fixed_abs, tag = 'smem constant byte address 0x4 - core index']
  #allocation1 [shape = 'u32[144,128]{1,0:T(1,128)}', space=vmem, size = 0x12000, scoped, tag = 'internal scratch']
  %s0 = inlined_call_operand.vmem [shape: f32[2048,12], index: 0, kind: input, shape index: {}]
  %s1 = inlined_call_operand.vmem [shape: f32[2048,36], index: 1, kind: input, shape index: {}]
  %s2 = inlined_call_operand.vmem [shape: bf16[36,12], index: 2, kind: input, shape index: {}]
  %s3 = inlined_call_operand.vmem [shape: f32[1,12], index: 3, kind: input, shape index: {}]
  %s4 = inlined_call_operand.vmem [shape: bf16[48,256], index: 4, kind: input, shape index: {}]
  %s5 = inlined_call_operand.vmem [shape: f32[1,256], index: 5, kind: input, shape index: {}]
  %s6 = inlined_call_operand.vmem [shape: bf16[256,256], index: 6, kind: input, shape index: {}]
  %s7 = inlined_call_operand.vmem [shape: f32[1,256], index: 7, kind: input, shape index: {}]
  %s8 = inlined_call_operand.vmem [shape: bf16[256,128], index: 8, kind: input, shape index: {}]
  %s9 = inlined_call_operand.vmem [shape: f32[1,128], index: 9, kind: input, shape index: {}]
  %s10 = inlined_call_operand.vmem [shape: f32[2048,12], index: 10, kind: output, shape index: {0}]
  %s11 = inlined_call_operand.vmem [shape: f32[2048,128], index: 11, kind: output, shape index: {1}]
  %12 = xla_tuple %s10, %s11
  %s13 = sld [smem:[#allocation0]]
  $region81: #{middle_decoder_forward.1} parent=0
    _
  %s15 = ssub.s32 1, %s13
  %s16 = scalar_select 0, %s15, %s13
  loop: start=0, step=1, limit=10
  $region2: #{middle_decoder_forward.1} parent=0 // loop_pre_header
    _
  $region3: #{middle_decoder_forward.1} parent=0 // loop_header
    %s18 = sphi 0, %s22
    %p19 = scmp.ge.s32.totalorder %s18, 10
    %s28 = sphi 0, %s30
    %s31 = sphi 0, %s28
    %s32 = sphi 0, %s31
    %s48 = sphi 0, %s32
    %s54 = sphi 0, %s56
    %s57 = sphi 0, %s54
    %s58 = sphi 0, %s57
    %s74 = sphi 0, %s58
    %s78 = sphi 0, %s78
    %s80 = sphi 0, %s78
    %s81 = sphi 0, %s80
    %s95 = sphi 0, %s81
    %s99 = sphi 0, %s99
    %s101 = sphi 0, %s99
    %s102 = sphi 0, %s101
    %s116 = sphi 0, %s102
    %s120 = sphi 0, %s120
    %s122 = sphi 0, %s120
    %s123 = sphi 0, %s122
    %s137 = sphi 0, %s123
    %s141 = sphi 0, %s141
    %s143 = sphi 0, %s141
    %s144 = sphi 0, %s143
    %s158 = sphi 0, %s144
    %s162 = sphi 0, %s162
    %s164 = sphi 0, %s162
    %s165 = sphi 0, %s164
    %s179 = sphi 0, %s165
    %s183 = sphi 0, %s183
    %s185 = sphi 0, %s183
    %s186 = sphi 0, %s185
    %s200 = sphi 0, %s186
    %s204 = sphi 0, %s204
    %s206 = sphi 0, %s204
    %s207 = sphi 0, %s206
    %s221 = sphi 0, %s207
    %s225 = sphi 0, %s225
    %s227 = sphi 0, %s225
    %s228 = sphi 0, %s227
    %s242 = sphi 0, %s228
    %s248 = sphi 0, %s250
    %s251 = sphi 0, %s248
    %s252 = sphi 0, %s251
    %s268 = sphi 0, %s252
    %s274 = sphi 0, %s276
    %s277 = sphi 0, %s274
    %s278 = sphi 0, %s277
    %s294 = sphi 0, %s278
  $region4: #{middle_decoder_forward.1} parent=0 // loop_header_branch
    %21 = sbr.rel (%p19) target = $region8
  $region5: #{middle_decoder_forward.1} parent=0 // loop_body
    %s23 = ssub.s32 %s18, 1
    %s24 = ssub.s32 %s18, 2
    %s25 = sadd.s32 %s18, 1
    %s26 = ssub.s32 %s18, %s25
    %p27 = scmp.eq.s32.totalorder %s26, 0
    %s29 = sadd.s32 %s28, 1
    %s30 = scalar_select %p27, %s28, %s29
    %p33 = pneg %p27
    %p34 = scmp.eq.s32.totalorder %s18, 7
    %p35 = por %p33, %p34
    %p36 = scmp.ne.s32.totalorder %s28, %s31
    %p37 = scmp.eq.s32.totalorder %s18, 0
    %p38 = por %p36, %p37
    %p39 = scmp.ne.s32.totalorder %s28, %s31
    %p40 = scmp.eq.s32.totalorder %s23, 7
    %p41 = por %p39, %p40
    %p42 = scmp.ne.s32.totalorder %s31, %s32
    %p43 = scmp.eq.s32.totalorder %s23, 0
    %p44 = por %p42, %p43
    %p45 = scmp.ne.s32.totalorder %s31, %s32
    %p46 = scmp.eq.s32.totalorder %s24, 7
    %p47 = por %p45, %p46
    %p49 = scmp.ne.s32.totalorder %s32, %s48
    %p50 = scmp.eq.s32.totalorder %s24, 0
    %p51 = por %p49, %p50
    %s52 = ssub.s32 %s18, %s25
    %p53 = scmp.eq.s32.totalorder %s52, 0
    %s55 = sadd.s32 %s54, 1
    %s56 = scalar_select %p53, %s54, %s55
    %p59 = pneg %p53
    %p60 = scmp.eq.s32.totalorder %s18, 7
    %p61 = por %p59, %p60
    %p62 = scmp.ne.s32.totalorder %s54, %s57
    %p63 = scmp.eq.s32.totalorder %s18, 0
    %p64 = por %p62, %p63
    %p65 = scmp.ne.s32.totalorder %s54, %s57
    %p66 = scmp.eq.s32.totalorder %s23, 7
    %p67 = por %p65, %p66
    %p68 = scmp.ne.s32.totalorder %s57, %s58
    %p69 = scmp.eq.s32.totalorder %s23, 0
    %p70 = por %p68, %p69
    %p71 = scmp.ne.s32.totalorder %s57, %s58
    %p72 = scmp.eq.s32.totalorder %s24, 7
    %p73 = por %p71, %p72
    %p75 = scmp.ne.s32.totalorder %s58, %s74
    %p76 = scmp.eq.s32.totalorder %s24, 0
    %p77 = por %p75, %p76
    %s79 = sadd.s32 %s78, 1
    %p82 = scmp.eq.s32.totalorder %s18, 7
    %p83 = scmp.ne.s32.totalorder %s78, %s80
    %p84 = scmp.eq.s32.totalorder %s18, 0
    %p85 = por %p83, %p84
    %p86 = scmp.ne.s32.totalorder %s78, %s80
    %p87 = scmp.eq.s32.totalorder %s23, 7
    %p88 = por %p86, %p87
    %p89 = scmp.ne.s32.totalorder %s80, %s81
    %p90 = scmp.eq.s32.totalorder %s23, 0
    %p91 = por %p89, %p90
    %p92 = scmp.ne.s32.totalorder %s80, %s81
    %p93 = scmp.eq.s32.totalorder %s24, 7
    %p94 = por %p92, %p93
    %p96 = scmp.ne.s32.totalorder %s81, %s95
    %p97 = scmp.eq.s32.totalorder %s24, 0
    %p98 = por %p96, %p97
    %s100 = sadd.s32 %s99, 1
    %p103 = scmp.eq.s32.totalorder %s18, 7
    %p104 = scmp.ne.s32.totalorder %s99, %s101
    %p105 = scmp.eq.s32.totalorder %s18, 0
    %p106 = por %p104, %p105
    %p107 = scmp.ne.s32.totalorder %s99, %s101
    %p108 = scmp.eq.s32.totalorder %s23, 7
    %p109 = por %p107, %p108
    %p110 = scmp.ne.s32.totalorder %s101, %s102
    %p111 = scmp.eq.s32.totalorder %s23, 0
    %p112 = por %p110, %p111
    %p113 = scmp.ne.s32.totalorder %s101, %s102
    %p114 = scmp.eq.s32.totalorder %s24, 7
    %p115 = por %p113, %p114
    %p117 = scmp.ne.s32.totalorder %s102, %s116
    %p118 = scmp.eq.s32.totalorder %s24, 0
    %p119 = por %p117, %p118
    %s121 = sadd.s32 %s120, 1
    %p124 = scmp.eq.s32.totalorder %s18, 7
    %p125 = scmp.ne.s32.totalorder %s120, %s122
    %p126 = scmp.eq.s32.totalorder %s18, 0
    %p127 = por %p125, %p126
    %p128 = scmp.ne.s32.totalorder %s120, %s122
    %p129 = scmp.eq.s32.totalorder %s23, 7
    %p130 = por %p128, %p129
    %p131 = scmp.ne.s32.totalorder %s122, %s123
    %p132 = scmp.eq.s32.totalorder %s23, 0
    %p133 = por %p131, %p132
    %p134 = scmp.ne.s32.totalorder %s122, %s123
    %p135 = scmp.eq.s32.totalorder %s24, 7
    %p136 = por %p134, %p135
    %p138 = scmp.ne.s32.totalorder %s123, %s137
    %p139 = scmp.eq.s32.totalorder %s24, 0
    %p140 = por %p138, %p139
    %s142 = sadd.s32 %s141, 1
    %p145 = scmp.eq.s32.totalorder %s18, 7
    %p146 = scmp.ne.s32.totalorder %s141, %s143
    %p147 = scmp.eq.s32.totalorder %s18, 0
    %p148 = por %p146, %p147
    %p149 = scmp.ne.s32.totalorder %s141, %s143
    %p150 = scmp.eq.s32.totalorder %s23, 7
    %p151 = por %p149, %p150
    %p152 = scmp.ne.s32.totalorder %s143, %s144
    %p153 = scmp.eq.s32.totalorder %s23, 0
    %p154 = por %p152, %p153
    %p155 = scmp.ne.s32.totalorder %s143, %s144
    %p156 = scmp.eq.s32.totalorder %s24, 7
    %p157 = por %p155, %p156
    %p159 = scmp.ne.s32.totalorder %s144, %s158
    %p160 = scmp.eq.s32.totalorder %s24, 0
    %p161 = por %p159, %p160
    %s163 = sadd.s32 %s162, 1
    %p166 = scmp.eq.s32.totalorder %s18, 7
    %p167 = scmp.ne.s32.totalorder %s162, %s164
    %p168 = scmp.eq.s32.totalorder %s18, 0
    %p169 = por %p167, %p168
    %p170 = scmp.ne.s32.totalorder %s162, %s164
    %p171 = scmp.eq.s32.totalorder %s23, 7
    %p172 = por %p170, %p171
    %p173 = scmp.ne.s32.totalorder %s164, %s165
    %p174 = scmp.eq.s32.totalorder %s23, 0
    %p175 = por %p173, %p174
    %p176 = scmp.ne.s32.totalorder %s164, %s165
    %p177 = scmp.eq.s32.totalorder %s24, 7
    %p178 = por %p176, %p177
    %p180 = scmp.ne.s32.totalorder %s165, %s179
    %p181 = scmp.eq.s32.totalorder %s24, 0
    %p182 = por %p180, %p181
    %s184 = sadd.s32 %s183, 1
    %p187 = scmp.eq.s32.totalorder %s18, 7
    %p188 = scmp.ne.s32.totalorder %s183, %s185
    %p189 = scmp.eq.s32.totalorder %s18, 0
    %p190 = por %p188, %p189
    %p191 = scmp.ne.s32.totalorder %s183, %s185
    %p192 = scmp.eq.s32.totalorder %s23, 7
    %p193 = por %p191, %p192
    %p194 = scmp.ne.s32.totalorder %s185, %s186
    %p195 = scmp.eq.s32.totalorder %s23, 0
    %p196 = por %p194, %p195
    %p197 = scmp.ne.s32.totalorder %s185, %s186
    %p198 = scmp.eq.s32.totalorder %s24, 7
    %p199 = por %p197, %p198
    %p201 = scmp.ne.s32.totalorder %s186, %s200
    %p202 = scmp.eq.s32.totalorder %s24, 0
    %p203 = por %p201, %p202
    %s205 = sadd.s32 %s204, 1
    %p208 = scmp.eq.s32.totalorder %s18, 7
    %p209 = scmp.ne.s32.totalorder %s204, %s206
    %p210 = scmp.eq.s32.totalorder %s18, 0
    %p211 = por %p209, %p210
    %p212 = scmp.ne.s32.totalorder %s204, %s206
    %p213 = scmp.eq.s32.totalorder %s23, 7
    %p214 = por %p212, %p213
    %p215 = scmp.ne.s32.totalorder %s206, %s207
    %p216 = scmp.eq.s32.totalorder %s23, 0
    %p217 = por %p215, %p216
    %p218 = scmp.ne.s32.totalorder %s206, %s207
    %p219 = scmp.eq.s32.totalorder %s24, 7
    %p220 = por %p218, %p219
    %p222 = scmp.ne.s32.totalorder %s207, %s221
    %p223 = scmp.eq.s32.totalorder %s24, 0
    %p224 = por %p222, %p223
    %s226 = sadd.s32 %s225, 1
    %p229 = scmp.eq.s32.totalorder %s18, 7
    %p230 = scmp.ne.s32.totalorder %s225, %s227
    %p231 = scmp.eq.s32.totalorder %s18, 0
    %p232 = por %p230, %p231
    %p233 = scmp.ne.s32.totalorder %s225, %s227
    %p234 = scmp.eq.s32.totalorder %s23, 7
    %p235 = por %p233, %p234
    %p236 = scmp.ne.s32.totalorder %s227, %s228
    %p237 = scmp.eq.s32.totalorder %s23, 0
    %p238 = por %p236, %p237
    %p239 = scmp.ne.s32.totalorder %s227, %s228
    %p240 = scmp.eq.s32.totalorder %s24, 7
    %p241 = por %p239, %p240
    %p243 = scmp.ne.s32.totalorder %s228, %s242
    %p244 = scmp.eq.s32.totalorder %s24, 0
    %p245 = por %p243, %p244
    %s246 = ssub.s32 %s18, %s25
    %p247 = scmp.eq.s32.totalorder %s246, 0
    %s249 = sadd.s32 %s248, 1
    %s250 = scalar_select %p247, %s248, %s249
    %p253 = pneg %p247
    %p254 = scmp.eq.s32.totalorder %s18, 7
    %p255 = por %p253, %p254
    %p256 = scmp.ne.s32.totalorder %s248, %s251
    %p257 = scmp.eq.s32.totalorder %s18, 0
    %p258 = por %p256, %p257
    %p259 = scmp.ne.s32.totalorder %s248, %s251
    %p260 = scmp.eq.s32.totalorder %s23, 7
    %p261 = por %p259, %p260
    %p262 = scmp.ne.s32.totalorder %s251, %s252
    %p263 = scmp.eq.s32.totalorder %s23, 0
    %p264 = por %p262, %p263
    %p265 = scmp.ne.s32.totalorder %s251, %s252
    %p266 = scmp.eq.s32.totalorder %s24, 7
    %p267 = por %p265, %p266
    %p269 = scmp.ne.s32.totalorder %s252, %s268
    %p270 = scmp.eq.s32.totalorder %s24, 0
    %p271 = por %p269, %p270
    %s272 = ssub.s32 %s18, %s25
    %p273 = scmp.eq.s32.totalorder %s272, 0
    %s275 = sadd.s32 %s274, 1
    %s276 = scalar_select %p273, %s274, %s275
    %p279 = pneg %p273
    %p280 = scmp.eq.s32.totalorder %s18, 7
    %p281 = por %p279, %p280
    %p282 = scmp.ne.s32.totalorder %s274, %s277
    %p283 = scmp.eq.s32.totalorder %s18, 0
    %p284 = por %p282, %p283
    %p285 = scmp.ne.s32.totalorder %s274, %s277
    %p286 = scmp.eq.s32.totalorder %s23, 7
    %p287 = por %p285, %p286
    %p288 = scmp.ne.s32.totalorder %s277, %s278
    %p289 = scmp.eq.s32.totalorder %s23, 0
    %p290 = por %p288, %p289
    %p291 = scmp.ne.s32.totalorder %s277, %s278
    %p292 = scmp.eq.s32.totalorder %s24, 7
    %p293 = por %p291, %p292
    %p295 = scmp.ne.s32.totalorder %s278, %s294
    %p296 = scmp.eq.s32.totalorder %s24, 0
    %p297 = por %p295, %p296
    %p298 = scmp.le.s32.totalorder 1, %s18
    %p299 = scmp.lt.s32.totalorder %s18, 9
    %p300 = pnand %p298, %p299
    %p301 = pneg %p300
    // Predicated region
    $region9: #{middle_decoder_forward.1} parent=5 // pred_check
      _
    $region10: #{middle_decoder_forward.1} parent=5 // pred_check_branch
      %303 = sbr.rel (%p300) target = $region12
    $region11: #{middle_decoder_forward.1} parent=5 // pred_region
      %s304 = ssub.s32 %s18, 1
      // Predicated region
      $region13: #{middle_decoder_forward.1} parent=11 // pred_check
        %p305 = pneg %p91
      $region14: #{middle_decoder_forward.1} parent=11 // pred_check_branch
        %307 = sbr.rel (%p305) target = $region16
      $region15: #{middle_decoder_forward.1} parent=11 // pred_region
        _
      $region16: #{middle_decoder_forward.1} parent=11 // pred_fallthru
        _
      // Predicated region
      $region17: #{middle_decoder_forward.1} parent=11 // pred_check
        %p308 = pneg %p112
      $region18: #{middle_decoder_forward.1} parent=11 // pred_check_branch
        %310 = sbr.rel (%p308) target = $region20
      $region19: #{middle_decoder_forward.1} parent=11 // pred_region
        _
      $region20: #{middle_decoder_forward.1} parent=11 // pred_fallthru
        _
      // Predicated region
      $region21: #{middle_decoder_forward.1} parent=11 // pred_check
        %p311 = pneg %p133
      $region22: #{middle_decoder_forward.1} parent=11 // pred_check_branch
        %313 = sbr.rel (%p311) target = $region24
      $region23: #{middle_decoder_forward.1} parent=11 // pred_region
        _
      $region24: #{middle_decoder_forward.1} parent=11 // pred_fallthru
        _
      // Predicated region
      $region25: #{middle_decoder_forward.1} parent=11 // pred_check
        %p314 = pneg %p154
      $region26: #{middle_decoder_forward.1} parent=11 // pred_check_branch
        %316 = sbr.rel (%p314) target = $region28
      $region27: #{middle_decoder_forward.1} parent=11 // pred_region
        _
      $region28: #{middle_decoder_forward.1} parent=11 // pred_fallthru
        _
      // Predicated region
      $region29: #{middle_decoder_forward.1} parent=11 // pred_check
        %p317 = pneg %p175
      $region30: #{middle_decoder_forward.1} parent=11 // pred_check_branch
        %319 = sbr.rel (%p317) target = $region32
      $region31: #{middle_decoder_forward.1} parent=11 // pred_region
        _
      $region32: #{middle_decoder_forward.1} parent=11 // pred_fallthru
        _
      // Predicated region
      $region33: #{middle_decoder_forward.1} parent=11 // pred_check
        %p320 = pneg %p196
      $region34: #{middle_decoder_forward.1} parent=11 // pred_check_branch
        %322 = sbr.rel (%p320) target = $region36
      $region35: #{middle_decoder_forward.1} parent=11 // pred_region
        _
      $region36: #{middle_decoder_forward.1} parent=11 // pred_fallthru
        _
      // Predicated region
      $region37: #{middle_decoder_forward.1} parent=11 // pred_check
        %p323 = pneg %p217
      $region38: #{middle_decoder_forward.1} parent=11 // pred_check_branch
        %325 = sbr.rel (%p323) target = $region40
      $region39: #{middle_decoder_forward.1} parent=11 // pred_region
        _
      $region40: #{middle_decoder_forward.1} parent=11 // pred_fallthru
        _
      // Predicated region
      $region41: #{middle_decoder_forward.1} parent=11 // pred_check
        %p326 = pneg %p238
      $region42: #{middle_decoder_forward.1} parent=11 // pred_check_branch
        %328 = sbr.rel (%p326) target = $region44
      $region43: #{middle_decoder_forward.1} parent=11 // pred_region
        _
      $region44: #{middle_decoder_forward.1} parent=11 // pred_fallthru
        _
    $region12: #{middle_decoder_forward.1} parent=5 // pred_fallthru
      _
    %p329 = scmp.lt.s32.totalorder %s18, 8
    // Predicated region
    $region45: #{middle_decoder_forward.1} parent=5 // pred_check
      %p330 = pneg %p329
    $region46: #{middle_decoder_forward.1} parent=5 // pred_check_branch
      %332 = sbr.rel (%p330) target = $region48
    $region47: #{middle_decoder_forward.1} parent=5 // pred_region
      // Predicated region
      $region49: #{middle_decoder_forward.1} parent=47 // pred_check
        %p333 = pneg %p38
      $region50: #{middle_decoder_forward.1} parent=47 // pred_check_branch
        %335 = sbr.rel (%p333) target = $region52
      $region51: #{middle_decoder_forward.1} parent=47 // pred_region
        %s336 = smul.u32 32, %s18
        %p337 = scmp.lt.s32.totalorder %s336, 255
        %s338 = scalar_select %p337, %s336, 255
        %s339 = smul.addr %s338, 8
        %s340 = scalar_lea.vmem %s0, %s339
        %s341 = smul.u32 32, %s18
      $region52: #{middle_decoder_forward.1} parent=47 // pred_fallthru
        _
      // Predicated region
      $region53: #{middle_decoder_forward.1} parent=47 // pred_check
        %p342 = pneg %p64
      $region54: #{middle_decoder_forward.1} parent=47 // pred_check_branch
        %344 = sbr.rel (%p342) target = $region56
      $region55: #{middle_decoder_forward.1} parent=47 // pred_region
        %s345 = smul.u32 32, %s18
        %p346 = scmp.lt.s32.totalorder %s345, 255
        %s347 = scalar_select %p346, %s345, 255
        %s348 = smul.addr %s347, 8
        %s349 = scalar_lea.vmem %s1, %s348
        %s350 = smul.u32 32, %s18
      $region56: #{middle_decoder_forward.1} parent=47 // pred_fallthru
        _
    $region48: #{middle_decoder_forward.1} parent=5 // pred_fallthru
      _
    %p351 = scmp.le.s32.totalorder 1, %s18
    %p352 = scmp.lt.s32.totalorder %s18, 9
    %p353 = pnand %p351, %p352
    %p354 = pneg %p353
    // Predicated region
    $region57: #{middle_decoder_forward.1} parent=5 // pred_check
      _
    $region58: #{middle_decoder_forward.1} parent=5 // pred_check_branch
      %356 = sbr.rel (%p353) target = $region60
    $region59: #{middle_decoder_forward.1} parent=5 // pred_region
      %s357 = ssub.s32 %s18, 1
      %s358 = smul.u32 32, %s23
      %p359 = scmp.lt.s32.totalorder %s358, 255
      %s360 = scalar_select %p359, %s358, 255
      %s361 = smul.addr %s360, 8
      %s362 = scalar_lea.vmem %s0, %s361
      %p363 = pneg %p44
      %p364 = pneg %p41
      %s365 = smul.u32 32, %s23
      %p366 = scmp.lt.s32.totalorder %s365, 255
      %s367 = scalar_select %p366, %s365, 255
      %s368 = smul.addr %s367, 8
      %s369 = scalar_lea.vmem %s1, %s368
      %p370 = pneg %p70
      %p371 = pneg %p67
      %p372 = pneg %p91
      %p373 = pneg %p88
      %p374 = pneg %p112
      %p375 = pneg %p109
      %p376 = pneg %p133
      %p377 = pneg %p130
      %p378 = pneg %p154
      %p379 = pneg %p151
      %p380 = pneg %p175
      %p381 = pneg %p172
      %p382 = pneg %p196
      %p383 = pneg %p193
      %p384 = pneg %p217
      %p385 = pneg %p214
      %p386 = pneg %p238
      %p387 = pneg %p235
      %p388 = pneg %p264
      %p389 = pneg %p261
      %s390 = smul.u32 32, %s23
      %p391 = scmp.lt.s32.totalorder %s390, 255
      %s392 = scalar_select %p391, %s390, 255
      %s393 = smul.addr %s392, 8
      %s394 = scalar_lea.vmem %s10, %s393
      %p395 = pneg %p290
      %p396 = pneg %p287
      %s397 = smul.u32 32, %s23
      %p398 = scmp.lt.s32.totalorder %s397, 255
      %s399 = scalar_select %p398, %s397, 255
      %s400 = smul.addr %s399, 8
      %s401 = scalar_lea.vmem %s11, %s400
      %s402 = smul.u32 32, %s23
      %p403 = scmp.lt.s32.totalorder %s402, 255
      %s404 = scalar_select %p403, %s402, 255
      %s405 = smul.addr %s404, 8
      %s406 = scalar_lea.vmem %s0, %s405
      %s407 = smul.u32 32, %s23
      %s408 = smul.u32 32, %s23
      %p409 = scmp.lt.s32.totalorder %s408, 255
      %s410 = scalar_select %p409, %s408, 255
      %s411 = smul.addr %s410, 8
      %s412 = scalar_lea.vmem %s1, %s411
      %s413 = smul.u32 32, %s23
      %s414 = smul.u32 32, %s23
      %p415 = scmp.lt.s32.totalorder %s414, 255
      %s416 = scalar_select %p415, %s414, 255
      %s417 = smul.addr %s416, 8
      %s418 = scalar_lea.vmem %s10, %s417
      %s419 = smul.u32 32, %s23
      %s420 = smul.u32 32, %s23
      %p421 = scmp.lt.s32.totalorder %s420, 255
      %s422 = scalar_select %p421, %s420, 255
      %s423 = smul.addr %s422, 8
      %s424 = scalar_lea.vmem %s11, %s423
      %s425 = smul.u32 32, %s23
      %v427 = vld [vmem:[%s412] sm:$0xff]
      %v428 = vld [vmem:[%s412 + $0x8] sm:$0xff]
      %v429 = vld [vmem:[%s412 + $0x10] sm:$0xff]
      %v430 = vld [vmem:[%s412 + $0x18] sm:$0xff]
      %v431 = vld [vmem:[%s412 + $0x20] sm:$0xff]
      %v432 = vld [vmem:[%s412 + $0x28] sm:$0xff]
      %v433 = vld [vmem:[%s412 + $0x30] sm:$0xff]
      %v434 = vld [vmem:[%s412 + $0x38] sm:$0xff]
      %v435 = vld [vmem:[%s412 + $0x40] sm:$0xff]
      %v436 = vld [vmem:[%s412 + $0x48] sm:$0xff]
      %v437 = vld [vmem:[%s412 + $0x50] sm:$0xff]
      %v438 = vld [vmem:[%s412 + $0x58] sm:$0xff]
      %v439 = vld [vmem:[%s412 + $0x60] sm:$0xff]
      %v440 = vld [vmem:[%s412 + $0x68] sm:$0xff]
      %v441 = vld [vmem:[%s412 + $0x70] sm:$0xff]
      %v442 = vld [vmem:[%s412 + $0x78] sm:$0xff]
      %v443 = vld [vmem:[%s412 + $0x80] sm:$0xff]
      %v444 = vld [vmem:[%s412 + $0x88] sm:$0xff]
      %v445 = vld [vmem:[%s412 + $0x90] sm:$0xff]
      %v446 = vld [vmem:[%s412 + $0x98] sm:$0xff]
      %v447 = vld [vmem:[%s412 + $0xa0] sm:$0xff]
      %v448 = vld [vmem:[%s412 + $0xa8] sm:$0xff]
      %v449 = vld [vmem:[%s412 + $0xb0] sm:$0xff]
      %v450 = vld [vmem:[%s412 + $0xb8] sm:$0xff]
      %v451 = vld [vmem:[%s412 + $0xc0] sm:$0xff]
      %v452 = vld [vmem:[%s412 + $0xc8] sm:$0xff]
      %v453 = vld [vmem:[%s412 + $0xd0] sm:$0xff]
      %v454 = vld [vmem:[%s412 + $0xd8] sm:$0xff]
      %v455 = vld [vmem:[%s412 + $0xe0] sm:$0xff]
      %v456 = vld [vmem:[%s412 + $0xe8] sm:$0xff]
      %v457 = vld [vmem:[%s412 + $0xf0] sm:$0xff]
      %v458 = vld [vmem:[%s412 + $0xf8] sm:$0xff]
      %v459 = vpack.c.bf16 %v428, %v427
      %v460 = vpack.c.bf16 %v430, %v429
      %v461 = vpack.c.bf16 %v432, %v431
      %v462 = vpack.c.bf16 %v434, %v433
      %v463 = vpack.c.bf16 %v436, %v435
      %v464 = vpack.c.bf16 %v438, %v437
      %v465 = vpack.c.bf16 %v440, %v439
      %v466 = vpack.c.bf16 %v442, %v441
      %v467 = vpack.c.bf16 %v444, %v443
      %v468 = vpack.c.bf16 %v446, %v445
      %v469 = vpack.c.bf16 %v448, %v447
      %v470 = vpack.c.bf16 %v450, %v449
      %v471 = vpack.c.bf16 %v452, %v451
      %v472 = vpack.c.bf16 %v454, %v453
      %v473 = vpack.c.bf16 %v456, %v455
      %v474 = vpack.c.bf16 %v458, %v457
      %v475 = vld [vmem:[%s2] sm:$0xf]
      %v476 = vld [vmem:[%s2 + $0x4] sm:$0xf]
      %v477 = vld [vmem:[%s2 + $0x8] sm:$0xf]
      %v478 = vld [vmem:[%s2 + $0xc] sm:$0xf]
      %v479 = vld [vmem:[%s2 + $0x10] sm:$0x3]
      %v480 = vld [vmem:[%s3] sm:$0x1]
      %v482 = vlaneseq
      %v483 = vshrl.u32 %v482, 7
      %v484 = vsub.s32 0, %v483
      %v485 = vrot.slane %v480, %v484
      %v492 = vunpack.c.l.b16 %v475
      %v493 = vunpack.c.l.b16 %v476
      %v494 = vunpack.c.l.b16 %v477
      %v495 = vunpack.c.l.b16 %v478
      %v496 = vunpack.c.l.b16 %v479
      %v497 = vpack.c.b16 %v493, %v492
      %v498 = vpack.c.b16 %v495, %v494
      %v499 = vpack.c.b16 %v496, %v496
      %vm502 = vcmask 293888
      %v504 = vsel %vm502, %v459, 0
      %v507 = vsel %vm502, %v460, 0
      %v510 = vsel %vm502, %v461, 0
      %v513 = vsel %vm502, %v462, 0
      %v516 = vsel %vm502, %v463, 0
      %v519 = vsel %vm502, %v464, 0
      %v522 = vsel %vm502, %v465, 0
      %v525 = vsel %vm502, %v466, 0
      %v528 = vsel %vm502, %v467, 0
      %v531 = vsel %vm502, %v468, 0
      %v534 = vsel %vm502, %v469, 0
      %v537 = vsel %vm502, %v470, 0
      %v540 = vsel %vm502, %v471, 0
      %v543 = vsel %vm502, %v472, 0
      %v546 = vsel %vm502, %v473, 0
      %v549 = vsel %vm502, %v474, 0
      %vm551 = vcmask 1041408
      %v553 = vsel %vm551, %v499, 0
      %555 = vmatprep.subr.bf16.mxu0 0
      %556 = vmatpush1.bf16.msra.mxu0 %v497
      %557 = vmatprep.subr.bf16.mxu0 0
      %558 = vmatpush1.bf16.msra.mxu0 %v498
      %559 = vmatprep.subr.bf16.mxu0 0
      %560 = vmatpush1.bf16.msra.mxu0 %v553
      %561 = vmatprep.subr.bf16.mxu0 0
      %562 = vmatpush1.bf16.msra.mxu0 0
      %563 = vmatprep.subr.bf16.mxu0 0
      %564 = vmatpush1.bf16.msra.mxu0 0
      %565 = vmatprep.subr.bf16.mxu0 0
      %566 = vmatpush1.bf16.msra.mxu0 0
      %567 = vmatprep.subr.bf16.mxu0 0
      %568 = vmatpush1.bf16.msra.mxu0 0
      %569 = vmatprep.subr.bf16.mxu0 0
      %570 = vmatpush1.bf16.msra.mxu0 0
      %571 = vmatprep.subr.bf16.mxu0 0
      %572 = vmatpush1.bf16.msra.mxu0 0
      %573 = vmatprep.subr.bf16.mxu0 0
      %574 = vmatpush1.bf16.msra.mxu0 0
      %575 = vmatprep.subr.bf16.mxu0 0
      %576 = vmatpush1.bf16.msra.mxu0 0
      %577 = vmatprep.subr.bf16.mxu0 0
      %578 = vmatpush1.bf16.msra.mxu0 0
      %579 = vmatprep.subr.bf16.mxu0 0
      %580 = vmatpush1.bf16.msra.mxu0 0
      %581 = vmatprep.subr.bf16.mxu0 0
      %582 = vmatpush1.bf16.msra.mxu0 0
      %583 = vmatprep.subr.bf16.mxu0 0
      %584 = vmatpush1.bf16.msra.mxu0 0
      %585 = vmatprep.subr.bf16.mxu0 0
      %586 = vmatpush1.bf16.msra.mxu0 0
      %587 = vmatprep.mubr.bf16.mxu0 0
      %588 = vmatmul.mubr.bf16.gmra.mrb[0].mxu0 %v504
      %v589 = vpop.f32.mrb[0].mxu0
      %v590 = vadd.f32 %v485, %v589
      %v591 = vpop.f32.mrb[0].mxu0
      %v592 = vpop.f32.mrb[0].mxu0
      %v593 = vadd.f32 %v485, %v592
      %v594 = vpop.f32.mrb[0].mxu0
      %595 = vmatprep.mubr.bf16.mxu0 0
      %596 = vmatmul.mubr.bf16.gmra.mrb[0].mxu0 %v507
      %v597 = vpop.f32.mrb[0].mxu0
      %v598 = vadd.f32 %v485, %v597
      %v599 = vpop.f32.mrb[0].mxu0
      %v600 = vpop.f32.mrb[0].mxu0
      %v601 = vadd.f32 %v485, %v600
      %v602 = vpop.f32.mrb[0].mxu0
      %603 = vmatprep.mubr.bf16.mxu0 0
      %604 = vmatmul.mubr.bf16.gmra.mrb[0].mxu0 %v510
      %v605 = vpop.f32.mrb[0].mxu0
      %v606 = vadd.f32 %v485, %v605
      %v607 = vpop.f32.mrb[0].mxu0
      %v608 = vpop.f32.mrb[0].mxu0
      %v609 = vadd.f32 %v485, %v608
      %v610 = vpop.f32.mrb[0].mxu0
      %611 = vmatprep.mubr.bf16.mxu0 0
      %612 = vmatmul.mubr.bf16.gmra.mrb[0].mxu0 %v513
      %v613 = vpop.f32.mrb[0].mxu0
      %v614 = vadd.f32 %v485, %v613
      %v615 = vpop.f32.mrb[0].mxu0
      %v616 = vpop.f32.mrb[0].mxu0
      %v617 = vadd.f32 %v485, %v616
      %v618 = vpop.f32.mrb[0].mxu0
      %619 = vmatprep.mubr.bf16.mxu0 0
      %620 = vmatmul.mubr.bf16.gmra.mrb[0].mxu0 %v516
      %v621 = vpop.f32.mrb[0].mxu0
      %v622 = vadd.f32 %v485, %v621
      %v623 = vpop.f32.mrb[0].mxu0
      %v624 = vpop.f32.mrb[0].mxu0
      %v625 = vadd.f32 %v485, %v624
      %v626 = vpop.f32.mrb[0].mxu0
      %627 = vmatprep.mubr.bf16.mxu0 0
      %628 = vmatmul.mubr.bf16.gmra.mrb[0].mxu0 %v519
      %v629 = vpop.f32.mrb[0].mxu0
      %v630 = vadd.f32 %v485, %v629
      %v631 = vpop.f32.mrb[0].mxu0
      %v632 = vpop.f32.mrb[0].mxu0
      %v633 = vadd.f32 %v485, %v632
      %v634 = vpop.f32.mrb[0].mxu0
      %635 = vmatprep.mubr.bf16.mxu0 0
      %636 = vmatmul.mubr.bf16.gmra.mrb[0].mxu0 %v522
      %v637 = vpop.f32.mrb[0].mxu0
      %v638 = vadd.f32 %v485, %v637
      %v639 = vpop.f32.mrb[0].mxu0
      %v640 = vpop.f32.mrb[0].mxu0
      %v641 = vadd.f32 %v485, %v640
      %v642 = vpop.f32.mrb[0].mxu0
      %643 = vmatprep.mubr.bf16.mxu0 0
      %644 = vmatmul.mubr.bf16.gmra.mrb[0].mxu0 %v525
      %v645 = vpop.f32.mrb[0].mxu0
      %v646 = vadd.f32 %v485, %v645
      %v647 = vpop.f32.mrb[0].mxu0
      %v648 = vpop.f32.mrb[0].mxu0
      %v649 = vadd.f32 %v485, %v648
      %v650 = vpop.f32.mrb[0].mxu0
      %651 = vmatprep.mubr.bf16.mxu0 0
      %652 = vmatmul.mubr.bf16.gmra.mrb[0].mxu0 %v528
      %v653 = vpop.f32.mrb[0].mxu0
      %v654 = vadd.f32 %v485, %v653
      %v655 = vpop.f32.mrb[0].mxu0
      %v656 = vpop.f32.mrb[0].mxu0
      %v657 = vadd.f32 %v485, %v656
      %v658 = vpop.f32.mrb[0].mxu0
      %659 = vmatprep.mubr.bf16.mxu0 0
      %660 = vmatmul.mubr.bf16.gmra.mrb[0].mxu0 %v531
      %v661 = vpop.f32.mrb[0].mxu0
      %v662 = vadd.f32 %v485, %v661
      %v663 = vpop.f32.mrb[0].mxu0
      %v664 = vpop.f32.mrb[0].mxu0
      %v665 = vadd.f32 %v485, %v664
      %v666 = vpop.f32.mrb[0].mxu0
      %667 = vmatprep.mubr.bf16.mxu0 0
      %668 = vmatmul.mubr.bf16.gmra.mrb[0].mxu0 %v534
      %v669 = vpop.f32.mrb[0].mxu0
      %v670 = vadd.f32 %v485, %v669
      %v671 = vpop.f32.mrb[0].mxu0
      %v672 = vpop.f32.mrb[0].mxu0
      %v673 = vadd.f32 %v485, %v672
      %v674 = vpop.f32.mrb[0].mxu0
      %675 = vmatprep.mubr.bf16.mxu0 0
      %676 = vmatmul.mubr.bf16.gmra.mrb[0].mxu0 %v537
      %v677 = vpop.f32.mrb[0].mxu0
      %v678 = vadd.f32 %v485, %v677
      %v679 = vpop.f32.mrb[0].mxu0
      %v680 = vpop.f32.mrb[0].mxu0
      %v681 = vadd.f32 %v485, %v680
      %v682 = vpop.f32.mrb[0].mxu0
      %683 = vmatprep.mubr.bf16.mxu0 0
      %684 = vmatmul.mubr.bf16.gmra.mrb[0].mxu0 %v540
      %v685 = vpop.f32.mrb[0].mxu0
      %v686 = vadd.f32 %v485, %v685
      %v687 = vpop.f32.mrb[0].mxu0
      %v688 = vpop.f32.mrb[0].mxu0
      %v689 = vadd.f32 %v485, %v688
      %v690 = vpop.f32.mrb[0].mxu0
      %691 = vmatprep.mubr.bf16.mxu0 0
      %692 = vmatmul.mubr.bf16.gmra.mrb[0].mxu0 %v543
      %v693 = vpop.f32.mrb[0].mxu0
      %v694 = vadd.f32 %v485, %v693
      %v695 = vpop.f32.mrb[0].mxu0
      %v696 = vpop.f32.mrb[0].mxu0
      %v697 = vadd.f32 %v485, %v696
      %v698 = vpop.f32.mrb[0].mxu0
      %699 = vmatprep.mubr.bf16.mxu0 0
      %700 = vmatmul.mubr.bf16.gmra.mrb[0].mxu0 %v546
      %v701 = vpop.f32.mrb[0].mxu0
      %v702 = vadd.f32 %v485, %v701
      %v703 = vpop.f32.mrb[0].mxu0
      %v704 = vpop.f32.mrb[0].mxu0
      %v705 = vadd.f32 %v485, %v704
      %v706 = vpop.f32.mrb[0].mxu0
      %707 = vmatprep.mubr.bf16.mxu0 0
      %708 = vmatmul.mubr.bf16.gmra.mrb[0].mxu0 %v549
      %v709 = vpop.f32.mrb[0].mxu0
      %v710 = vadd.f32 %v485, %v709
      %v711 = vpop.f32.mrb[0].mxu0
      %v712 = vpop.f32.mrb[0].mxu0
      %v713 = vadd.f32 %v485, %v712
      %v714 = vpop.f32.mrb[0].mxu0
      %715 = vdwg.mxu0
      %v716 = vtanh.pop %v590
      %v717 = vtanh.pop %v593
      %v718 = vtanh.pop %v598
      %v719 = vtanh.pop %v601
      %v720 = vtanh.pop %v606
      %v721 = vtanh.pop %v609
      %v722 = vtanh.pop %v614
      %v723 = vtanh.pop %v617
      %v724 = vtanh.pop %v622
      %v725 = vtanh.pop %v625
      %v726 = vtanh.pop %v630
      %v727 = vtanh.pop %v633
      %v728 = vtanh.pop %v638
      %v729 = vtanh.pop %v641
      %v730 = vtanh.pop %v646
      %v731 = vtanh.pop %v649
      %v732 = vtanh.pop %v654
      %v733 = vtanh.pop %v657
      %v734 = vtanh.pop %v662
      %v735 = vtanh.pop %v665
      %v736 = vtanh.pop %v670
      %v737 = vtanh.pop %v673
      %v738 = vtanh.pop %v678
      %v739 = vtanh.pop %v681
      %v740 = vtanh.pop %v686
      %v741 = vtanh.pop %v689
      %v742 = vtanh.pop %v694
      %v743 = vtanh.pop %v697
      %v744 = vtanh.pop %v702
      %v745 = vtanh.pop %v705
      %v746 = vtanh.pop %v710
      %v747 = vtanh.pop %v713
      %780 = vrot.lane.b32.xlu0 %v427, 12
      %v781 = vpop.permute.xlu0 %780
      %782 = vrot.lane.b32.xlu0 %v428, 12
      %v783 = vpop.permute.xlu0 %782
      %784 = vrot.lane.b32.xlu0 %v429, 12
      %v785 = vpop.permute.xlu0 %784
      %786 = vrot.lane.b32.xlu0 %v430, 12
      %v787 = vpop.permute.xlu0 %786
      %788 = vrot.lane.b32.xlu0 %v431, 12
      %v789 = vpop.permute.xlu0 %788
      %790 = vrot.lane.b32.xlu0 %v432, 12
      %v791 = vpop.permute.xlu0 %790
      %792 = vrot.lane.b32.xlu0 %v433, 12
      %v793 = vpop.permute.xlu0 %792
      %794 = vrot.lane.b32.xlu0 %v434, 12
      %v795 = vpop.permute.xlu0 %794
      %796 = vrot.lane.b32.xlu0 %v435, 12
      %v797 = vpop.permute.xlu0 %796
      %798 = vrot.lane.b32.xlu0 %v436, 12
      %v799 = vpop.permute.xlu0 %798
      %800 = vrot.lane.b32.xlu0 %v437, 12
      %v801 = vpop.permute.xlu0 %800
      %802 = vrot.lane.b32.xlu0 %v438, 12
      %v803 = vpop.permute.xlu0 %802
      %804 = vrot.lane.b32.xlu0 %v439, 12
      %v805 = vpop.permute.xlu0 %804
      %806 = vrot.lane.b32.xlu0 %v440, 12
      %v807 = vpop.permute.xlu0 %806
      %808 = vrot.lane.b32.xlu0 %v441, 12
      %v809 = vpop.permute.xlu0 %808
      %810 = vrot.lane.b32.xlu0 %v442, 12
      %v811 = vpop.permute.xlu0 %810
      %812 = vrot.lane.b32.xlu0 %v443, 12
      %v813 = vpop.permute.xlu0 %812
      %814 = vrot.lane.b32.xlu0 %v444, 12
      %v815 = vpop.permute.xlu0 %814
      %816 = vrot.lane.b32.xlu0 %v445, 12
      %v817 = vpop.permute.xlu0 %816
      %818 = vrot.lane.b32.xlu0 %v446, 12
      %v819 = vpop.permute.xlu0 %818
      %820 = vrot.lane.b32.xlu0 %v447, 12
      %v821 = vpop.permute.xlu0 %820
      %822 = vrot.lane.b32.xlu0 %v448, 12
      %v823 = vpop.permute.xlu0 %822
      %824 = vrot.lane.b32.xlu0 %v449, 12
      %v825 = vpop.permute.xlu0 %824
      %826 = vrot.lane.b32.xlu0 %v450, 12
      %v827 = vpop.permute.xlu0 %826
      %828 = vrot.lane.b32.xlu0 %v451, 12
      %v829 = vpop.permute.xlu0 %828
      %830 = vrot.lane.b32.xlu0 %v452, 12
      %v831 = vpop.permute.xlu0 %830
      %832 = vrot.lane.b32.xlu0 %v453, 12
      %v833 = vpop.permute.xlu0 %832
      %834 = vrot.lane.b32.xlu0 %v454, 12
      %v835 = vpop.permute.xlu0 %834
      %836 = vrot.lane.b32.xlu0 %v455, 12
      %v837 = vpop.permute.xlu0 %836
      %838 = vrot.lane.b32.xlu0 %v456, 12
      %v839 = vpop.permute.xlu0 %838
      %840 = vrot.lane.b32.xlu0 %v457, 12
      %v841 = vpop.permute.xlu0 %840
      %842 = vrot.lane.b32.xlu0 %v458, 12
      %v843 = vpop.permute.xlu0 %842
      %vm876 = vcmask 97280
      %v877 = vsel %vm876, %v716, %v781
      %v878 = vsel %vm876, %v717, %v783
      %v879 = vsel %vm876, %v718, %v785
      %v880 = vsel %vm876, %v719, %v787
      %v881 = vsel %vm876, %v720, %v789
      %v882 = vsel %vm876, %v721, %v791
      %v883 = vsel %vm876, %v722, %v793
      %v884 = vsel %vm876, %v723, %v795
      %v885 = vsel %vm876, %v724, %v797
      %v886 = vsel %vm876, %v725, %v799
      %v887 = vsel %vm876, %v726, %v801
      %v888 = vsel %vm876, %v727, %v803
      %v889 = vsel %vm876, %v728, %v805
      %v890 = vsel %vm876, %v729, %v807
      %v891 = vsel %vm876, %v730, %v809
      %v892 = vsel %vm876, %v731, %v811
      %v893 = vsel %vm876, %v732, %v813
      %v894 = vsel %vm876, %v733, %v815
      %v895 = vsel %vm876, %v734, %v817
      %v896 = vsel %vm876, %v735, %v819
      %v897 = vsel %vm876, %v736, %v821
      %v898 = vsel %vm876, %v737, %v823
      %v899 = vsel %vm876, %v738, %v825
      %v900 = vsel %vm876, %v739, %v827
      %v901 = vsel %vm876, %v740, %v829
      %v902 = vsel %vm876, %v741, %v831
      %v903 = vsel %vm876, %v742, %v833
      %v904 = vsel %vm876, %v743, %v835
      %v905 = vsel %vm876, %v744, %v837
      %v906 = vsel %vm876, %v745, %v839
      %v907 = vsel %vm876, %v746, %v841
      %v908 = vsel %vm876, %v747, %v843
      %v909 = vpack.c.bf16 %v878, %v877
      %v910 = vpack.c.bf16 %v880, %v879
      %v911 = vpack.c.bf16 %v882, %v881
      %v912 = vpack.c.bf16 %v884, %v883
      %v913 = vpack.c.bf16 %v886, %v885
      %v914 = vpack.c.bf16 %v888, %v887
      %v915 = vpack.c.bf16 %v890, %v889
      %v916 = vpack.c.bf16 %v892, %v891
      %v917 = vpack.c.bf16 %v894, %v893
      %v918 = vpack.c.bf16 %v896, %v895
      %v919 = vpack.c.bf16 %v898, %v897
      %v920 = vpack.c.bf16 %v900, %v899
      %v921 = vpack.c.bf16 %v902, %v901
      %v922 = vpack.c.bf16 %v904, %v903
      %v923 = vpack.c.bf16 %v906, %v905
      %v924 = vpack.c.bf16 %v908, %v907
      %v925 = vld [vmem:[%s4] sm:$0xff]
      %v926 = vld [vmem:[%s4 + $0x8] sm:$0xff]
      %v927 = vld [vmem:[%s4 + $0x10] sm:$0xff]
      %v928 = vld [vmem:[%s4 + $0x18] sm:$0xff]
      %v929 = vld [vmem:[%s4 + $0x20] sm:$0xff]
      %v930 = vld [vmem:[%s4 + $0x28] sm:$0xff]
      %v931 = vld [vmem:[%s5] sm:$0x3]
      %v933 = vlaneseq
      %v934 = vshrl.u32 %v933, 7
      %v935 = vsub.s32 0, %v934
      %v936 = vrot.slane %v931, %v935
      %v937 = vlaneseq
      %v938 = vshrl.u32 %v937, 7
      %v939 = vsub.s32 1, %v938
      %v940 = vrot.slane %v931, %v939
      %v949 = vunpack.c.l.b16 %v925
      %v950 = vunpack.c.h.b16 %v925
      %v951 = vunpack.c.l.b16 %v926
      %v952 = vunpack.c.h.b16 %v926
      %v953 = vunpack.c.l.b16 %v927
      %v954 = vunpack.c.h.b16 %v927
      %v955 = vunpack.c.l.b16 %v928
      %v956 = vunpack.c.h.b16 %v928
      %v957 = vunpack.c.l.b16 %v929
      %v958 = vunpack.c.h.b16 %v929
      %v959 = vunpack.c.l.b16 %v930
      %v960 = vunpack.c.h.b16 %v930
      %v961 = vpack.c.b16 %v951, %v949
      %v962 = vpack.c.b16 %v952, %v950
      %v963 = vpack.c.b16 %v955, %v953
      %v964 = vpack.c.b16 %v956, %v954
      %v965 = vpack.c.b16 %v959, %v957
      %v966 = vpack.c.b16 %v960, %v958
      %vm973 = vcmask 392192
      %v975 = vsel %vm973, %v909, 0
      %v978 = vsel %vm973, %v910, 0
      %v981 = vsel %vm973, %v911, 0
      %v984 = vsel %vm973, %v912, 0
      %v987 = vsel %vm973, %v913, 0
      %v990 = vsel %vm973, %v914, 0
      %v993 = vsel %vm973, %v915, 0
      %v996 = vsel %vm973, %v916, 0
      %v999 = vsel %vm973, %v917, 0
      %v1002 = vsel %vm973, %v918, 0
      %v1005 = vsel %vm973, %v919, 0
      %v1008 = vsel %vm973, %v920, 0
      %v1011 = vsel %vm973, %v921, 0
      %v1014 = vsel %vm973, %v922, 0
      %v1017 = vsel %vm973, %v923, 0
      %v1020 = vsel %vm973, %v924, 0
      %1022 = vmatprep.subr.bf16.mxu0 %v962
      %1023 = vmatpush1.bf16.msra.mxu0 %v961
      %1024 = vmatprep.subr.bf16.mxu0 %v964
      %1025 = vmatpush1.bf16.msra.mxu0 %v963
      %1026 = vmatprep.subr.bf16.mxu0 %v966
      %1027 = vmatpush1.bf16.msra.mxu0 %v965
      %1028 = vmatprep.subr.bf16.mxu0 0
      %1029 = vmatpush1.bf16.msra.mxu0 0
      %1030 = vmatprep.subr.bf16.mxu0 0
      %1031 = vmatpush1.bf16.msra.mxu0 0
      %1032 = vmatprep.subr.bf16.mxu0 0
      %1033 = vmatpush1.bf16.msra.mxu0 0
      %1034 = vmatprep.subr.bf16.mxu0 0
      %1035 = vmatpush1.bf16.msra.mxu0 0
      %1036 = vmatprep.subr.bf16.mxu0 0
      %1037 = vmatpush1.bf16.msra.mxu0 0
      %1038 = vmatprep.subr.bf16.mxu0 0
      %1039 = vmatpush1.bf16.msra.mxu0 0
      %1040 = vmatprep.subr.bf16.mxu0 0
      %1041 = vmatpush1.bf16.msra.mxu0 0
      %1042 = vmatprep.subr.bf16.mxu0 0
      %1043 = vmatpush1.bf16.msra.mxu0 0
      %1044 = vmatprep.subr.bf16.mxu0 0
      %1045 = vmatpush1.bf16.msra.mxu0 0
      %1046 = vmatprep.subr.bf16.mxu0 0
      %1047 = vmatpush1.bf16.msra.mxu0 0
      %1048 = vmatprep.subr.bf16.mxu0 0
      %1049 = vmatpush1.bf16.msra.mxu0 0
      %1050 = vmatprep.subr.bf16.mxu0 0
      %1051 = vmatpush1.bf16.msra.mxu0 0
      %1052 = vmatprep.subr.bf16.mxu0 0
      %1053 = vmatpush1.bf16.msra.mxu0 0
      %1054 = vmatprep.mubr.bf16.mxu0 0
      %1055 = vmatmul.mubr.bf16.gmra.mrb[0].mxu0 %v975
      %v1056 = vpop.f32.mrb[0].mxu0
      %v1057 = vadd.f32 %v936, %v1056
      %v1058 = vpop.f32.mrb[0].mxu0
      %v1059 = vadd.f32 %v940, %v1058
      %v1060 = vpop.f32.mrb[0].mxu0
      %v1061 = vadd.f32 %v936, %v1060
      %v1062 = vpop.f32.mrb[0].mxu0
      %v1063 = vadd.f32 %v940, %v1062
      %1064 = vmatprep.mubr.bf16.mxu0 0
      %1065 = vmatmul.mubr.bf16.gmra.mrb[0].mxu0 %v978
      %v1066 = vpop.f32.mrb[0].mxu0
      %v1067 = vadd.f32 %v936, %v1066
      %v1068 = vpop.f32.mrb[0].mxu0
      %v1069 = vadd.f32 %v940, %v1068
      %v1070 = vpop.f32.mrb[0].mxu0
      %v1071 = vadd.f32 %v936, %v1070
      %v1072 = vpop.f32.mrb[0].mxu0
      %v1073 = vadd.f32 %v940, %v1072
      %1074 = vmatprep.mubr.bf16.mxu0 0
      %1075 = vmatmul.mubr.bf16.gmra.mrb[0].mxu0 %v981
      %v1076 = vpop.f32.mrb[0].mxu0
      %v1077 = vadd.f32 %v936, %v1076
      %v1078 = vpop.f32.mrb[0].mxu0
      %v1079 = vadd.f32 %v940, %v1078
      %v1080 = vpop.f32.mrb[0].mxu0
      %v1081 = vadd.f32 %v936, %v1080
      %v1082 = vpop.f32.mrb[0].mxu0
      %v1083 = vadd.f32 %v940, %v1082
      %1084 = vmatprep.mubr.bf16.mxu0 0
      %1085 = vmatmul.mubr.bf16.gmra.mrb[0].mxu0 %v984
      %v1086 = vpop.f32.mrb[0].mxu0
      %v1087 = vadd.f32 %v936, %v1086
      %v1088 = vpop.f32.mrb[0].mxu0
      %v1089 = vadd.f32 %v940, %v1088
      %v1090 = vpop.f32.mrb[0].mxu0
      %v1091 = vadd.f32 %v936, %v1090
      %v1092 = vpop.f32.mrb[0].mxu0
      %v1093 = vadd.f32 %v940, %v1092
      %1094 = vmatprep.mubr.bf16.mxu0 0
      %1095 = vmatmul.mubr.bf16.gmra.mrb[0].mxu0 %v987
      %v1096 = vpop.f32.mrb[0].mxu0
      %v1097 = vadd.f32 %v936, %v1096
      %v1098 = vpop.f32.mrb[0].mxu0
      %v1099 = vadd.f32 %v940, %v1098
      %v1100 = vpop.f32.mrb[0].mxu0
      %v1101 = vadd.f32 %v936, %v1100
      %v1102 = vpop.f32.mrb[0].mxu0
      %v1103 = vadd.f32 %v940, %v1102
      %1104 = vmatprep.mubr.bf16.mxu0 0
      %1105 = vmatmul.mubr.bf16.gmra.mrb[0].mxu0 %v990
      %v1106 = vpop.f32.mrb[0].mxu0
      %v1107 = vadd.f32 %v936, %v1106
      %v1108 = vpop.f32.mrb[0].mxu0
      %v1109 = vadd.f32 %v940, %v1108
      %v1110 = vpop.f32.mrb[0].mxu0
      %v1111 = vadd.f32 %v936, %v1110
      %v1112 = vpop.f32.mrb[0].mxu0
      %v1113 = vadd.f32 %v940, %v1112
      %1114 = vmatprep.mubr.bf16.mxu0 0
      %1115 = vmatmul.mubr.bf16.gmra.mrb[0].mxu0 %v993
      %v1116 = vpop.f32.mrb[0].mxu0
      %v1117 = vadd.f32 %v936, %v1116
      %v1118 = vpop.f32.mrb[0].mxu0
      %v1119 = vadd.f32 %v940, %v1118
      %v1120 = vpop.f32.mrb[0].mxu0
      %v1121 = vadd.f32 %v936, %v1120
      %v1122 = vpop.f32.mrb[0].mxu0
      %v1123 = vadd.f32 %v940, %v1122
      %1124 = vmatprep.mubr.bf16.mxu0 0
      %1125 = vmatmul.mubr.bf16.gmra.mrb[0].mxu0 %v996
      %v1126 = vpop.f32.mrb[0].mxu0
      %v1127 = vadd.f32 %v936, %v1126
      %v1128 = vpop.f32.mrb[0].mxu0
      %v1129 = vadd.f32 %v940, %v1128
      %v1130 = vpop.f32.mrb[0].mxu0
      %v1131 = vadd.f32 %v936, %v1130
      %v1132 = vpop.f32.mrb[0].mxu0
      %v1133 = vadd.f32 %v940, %v1132
      %1134 = vmatprep.mubr.bf16.mxu0 0
      %1135 = vmatmul.mubr.bf16.gmra.mrb[0].mxu0 %v999
      %v1136 = vpop.f32.mrb[0].mxu0
      %v1137 = vadd.f32 %v936, %v1136
      %v1138 = vpop.f32.mrb[0].mxu0
      %v1139 = vadd.f32 %v940, %v1138
      %v1140 = vpop.f32.mrb[0].mxu0
      %v1141 = vadd.f32 %v936, %v1140
      %v1142 = vpop.f32.mrb[0].mxu0
      %v1143 = vadd.f32 %v940, %v1142
      %1144 = vmatprep.mubr.bf16.mxu0 0
      %1145 = vmatmul.mubr.bf16.gmra.mrb[0].mxu0 %v1002
      %v1146 = vpop.f32.mrb[0].mxu0
      %v1147 = vadd.f32 %v936, %v1146
      %v1148 = vpop.f32.mrb[0].mxu0
      %v1149 = vadd.f32 %v940, %v1148
      %v1150 = vpop.f32.mrb[0].mxu0
      %v1151 = vadd.f32 %v936, %v1150
      %v1152 = vpop.f32.mrb[0].mxu0
      %v1153 = vadd.f32 %v940, %v1152
      %1154 = vmatprep.mubr.bf16.mxu0 0
      %1155 = vmatmul.mubr.bf16.gmra.mrb[0].mxu0 %v1005
      %v1156 = vpop.f32.mrb[0].mxu0
      %v1157 = vadd.f32 %v936, %v1156
      %v1158 = vpop.f32.mrb[0].mxu0
      %v1159 = vadd.f32 %v940, %v1158
      %v1160 = vpop.f32.mrb[0].mxu0
      %v1161 = vadd.f32 %v936, %v1160
      %v1162 = vpop.f32.mrb[0].mxu0
      %v1163 = vadd.f32 %v940, %v1162
      %1164 = vmatprep.mubr.bf16.mxu0 0
      %1165 = vmatmul.mubr.bf16.gmra.mrb[0].mxu0 %v1008
      %v1166 = vpop.f32.mrb[0].mxu0
      %v1167 = vadd.f32 %v936, %v1166
      %v1168 = vpop.f32.mrb[0].mxu0
      %v1169 = vadd.f32 %v940, %v1168
      %v1170 = vpop.f32.mrb[0].mxu0
      %v1171 = vadd.f32 %v936, %v1170
      %v1172 = vpop.f32.mrb[0].mxu0
      %v1173 = vadd.f32 %v940, %v1172
      %1174 = vmatprep.mubr.bf16.mxu0 0
      %1175 = vmatmul.mubr.bf16.gmra.mrb[0].mxu0 %v1011
      %v1176 = vpop.f32.mrb[0].mxu0
      %v1177 = vadd.f32 %v936, %v1176
      %v1178 = vpop.f32.mrb[0].mxu0
      %v1179 = vadd.f32 %v940, %v1178
      %v1180 = vpop.f32.mrb[0].mxu0
      %v1181 = vadd.f32 %v936, %v1180
      %v1182 = vpop.f32.mrb[0].mxu0
      %v1183 = vadd.f32 %v940, %v1182
      %1184 = vmatprep.mubr.bf16.mxu0 0
      %1185 = vmatmul.mubr.bf16.gmra.mrb[0].mxu0 %v1014
      %v1186 = vpop.f32.mrb[0].mxu0
      %v1187 = vadd.f32 %v936, %v1186
      %v1188 = vpop.f32.mrb[0].mxu0
      %v1189 = vadd.f32 %v940, %v1188
      %v1190 = vpop.f32.mrb[0].mxu0
      %v1191 = vadd.f32 %v936, %v1190
      %v1192 = vpop.f32.mrb[0].mxu0
      %v1193 = vadd.f32 %v940, %v1192
      %1194 = vmatprep.mubr.bf16.mxu0 0
      %1195 = vmatmul.mubr.bf16.gmra.mrb[0].mxu0 %v1017
      %v1196 = vpop.f32.mrb[0].mxu0
      %v1197 = vadd.f32 %v936, %v1196
      %v1198 = vpop.f32.mrb[0].mxu0
      %v1199 = vadd.f32 %v940, %v1198
      %v1200 = vpop.f32.mrb[0].mxu0
      %v1201 = vadd.f32 %v936, %v1200
      %v1202 = vpop.f32.mrb[0].mxu0
      %v1203 = vadd.f32 %v940, %v1202
      %1204 = vmatprep.mubr.bf16.mxu0 0
      %1205 = vmatmul.mubr.bf16.gmra.mrb[0].mxu0 %v1020
      %v1206 = vpop.f32.mrb[0].mxu0
      %v1207 = vadd.f32 %v936, %v1206
      %v1208 = vpop.f32.mrb[0].mxu0
      %v1209 = vadd.f32 %v940, %v1208
      %v1210 = vpop.f32.mrb[0].mxu0
      %v1211 = vadd.f32 %v936, %v1210
      %v1212 = vpop.f32.mrb[0].mxu0
      %v1213 = vadd.f32 %v940, %v1212
      %1214 = vdwg.mxu0
      %v1215 = vmax.f32 %v1057, 0.0
      %v1216 = vmax.f32 %v1059, 0.0
      %v1217 = vmax.f32 %v1061, 0.0
      %v1218 = vmax.f32 %v1063, 0.0
      %v1219 = vmax.f32 %v1067, 0.0
      %v1220 = vmax.f32 %v1069, 0.0
      %v1221 = vmax.f32 %v1071, 0.0
      %v1222 = vmax.f32 %v1073, 0.0
      %v1223 = vmax.f32 %v1077, 0.0
      %v1224 = vmax.f32 %v1079, 0.0
      %v1225 = vmax.f32 %v1081, 0.0
      %v1226 = vmax.f32 %v1083, 0.0
      %v1227 = vmax.f32 %v1087, 0.0
      %v1228 = vmax.f32 %v1089, 0.0
      %v1229 = vmax.f32 %v1091, 0.0
      %v1230 = vmax.f32 %v1093, 0.0
      %v1231 = vmax.f32 %v1097, 0.0
      %v1232 = vmax.f32 %v1099, 0.0
      %v1233 = vmax.f32 %v1101, 0.0
      %v1234 = vmax.f32 %v1103, 0.0
      %v1235 = vmax.f32 %v1107, 0.0
      %v1236 = vmax.f32 %v1109, 0.0
      %v1237 = vmax.f32 %v1111, 0.0
      %v1238 = vmax.f32 %v1113, 0.0
      %v1239 = vmax.f32 %v1117, 0.0
      %v1240 = vmax.f32 %v1119, 0.0
      %v1241 = vmax.f32 %v1121, 0.0
      %v1242 = vmax.f32 %v1123, 0.0
      %v1243 = vmax.f32 %v1127, 0.0
      %v1244 = vmax.f32 %v1129, 0.0
      %v1245 = vmax.f32 %v1131, 0.0
      %v1246 = vmax.f32 %v1133, 0.0
      %v1247 = vmax.f32 %v1137, 0.0
      %v1248 = vmax.f32 %v1139, 0.0
      %v1249 = vmax.f32 %v1141, 0.0
      %v1250 = vmax.f32 %v1143, 0.0
      %v1251 = vmax.f32 %v1147, 0.0
      %v1252 = vmax.f32 %v1149, 0.0
      %v1253 = vmax.f32 %v1151, 0.0
      %v1254 = vmax.f32 %v1153, 0.0
      %v1255 = vmax.f32 %v1157, 0.0
      %v1256 = vmax.f32 %v1159, 0.0
      %v1257 = vmax.f32 %v1161, 0.0
      %v1258 = vmax.f32 %v1163, 0.0
      %v1259 = vmax.f32 %v1167, 0.0
      %v1260 = vmax.f32 %v1169, 0.0
      %v1261 = vmax.f32 %v1171, 0.0
      %v1262 = vmax.f32 %v1173, 0.0
      %v1263 = vmax.f32 %v1177, 0.0
      %v1264 = vmax.f32 %v1179, 0.0
      %v1265 = vmax.f32 %v1181, 0.0
      %v1266 = vmax.f32 %v1183, 0.0
      %v1267 = vmax.f32 %v1187, 0.0
      %v1268 = vmax.f32 %v1189, 0.0
      %v1269 = vmax.f32 %v1191, 0.0
      %v1270 = vmax.f32 %v1193, 0.0
      %v1271 = vmax.f32 %v1197, 0.0
      %v1272 = vmax.f32 %v1199, 0.0
      %v1273 = vmax.f32 %v1201, 0.0
      %v1274 = vmax.f32 %v1203, 0.0
      %v1275 = vmax.f32 %v1207, 0.0
      %v1276 = vmax.f32 %v1209, 0.0
      %v1277 = vmax.f32 %v1211, 0.0
      %v1278 = vmax.f32 %v1213, 0.0
      %v1279 = vpack.c.bf16 %v1217, %v1215
      %v1280 = vpack.c.bf16 %v1218, %v1216
      %v1281 = vpack.c.bf16 %v1221, %v1219
      %v1282 = vpack.c.bf16 %v1222, %v1220
      %v1283 = vpack.c.bf16 %v1225, %v1223
      %v1284 = vpack.c.bf16 %v1226, %v1224
      %v1285 = vpack.c.bf16 %v1229, %v1227
      %v1286 = vpack.c.bf16 %v1230, %v1228
      %v1287 = vpack.c.bf16 %v1233, %v1231
      %v1288 = vpack.c.bf16 %v1234, %v1232
      %v1289 = vpack.c.bf16 %v1237, %v1235
      %v1290 = vpack.c.bf16 %v1238, %v1236
      %v1291 = vpack.c.bf16 %v1241, %v1239
      %v1292 = vpack.c.bf16 %v1242, %v1240
      %v1293 = vpack.c.bf16 %v1245, %v1243
      %v1294 = vpack.c.bf16 %v1246, %v1244
      %v1295 = vpack.c.bf16 %v1249, %v1247
      %v1296 = vpack.c.bf16 %v1250, %v1248
      %v1297 = vpack.c.bf16 %v1253, %v1251
      %v1298 = vpack.c.bf16 %v1254, %v1252
      %v1299 = vpack.c.bf16 %v1257, %v1255
      %v1300 = vpack.c.bf16 %v1258, %v1256
      %v1301 = vpack.c.bf16 %v1261, %v1259
      %v1302 = vpack.c.bf16 %v1262, %v1260
      %v1303 = vpack.c.bf16 %v1265, %v1263
      %v1304 = vpack.c.bf16 %v1266, %v1264
      %v1305 = vpack.c.bf16 %v1269, %v1267
      %v1306 = vpack.c.bf16 %v1270, %v1268
      %v1307 = vpack.c.bf16 %v1273, %v1271
      %v1308 = vpack.c.bf16 %v1274, %v1272
      %v1309 = vpack.c.bf16 %v1277, %v1275
      %v1310 = vpack.c.bf16 %v1278, %v1276
      %v1311 = vld [vmem:[%s6] sm:$0xff]
      %v1312 = vld [vmem:[%s6 + $0x8] sm:$0xff]
      %v1313 = vld [vmem:[%s6 + $0x10] sm:$0xff]
      %v1314 = vld [vmem:[%s6 + $0x18] sm:$0xff]
      %v1315 = vld [vmem:[%s6 + $0x20] sm:$0xff]
      %v1316 = vld [vmem:[%s6 + $0x28] sm:$0xff]
      %v1317 = vld [vmem:[%s6 + $0x30] sm:$0xff]
      %v1318 = vld [vmem:[%s6 + $0x38] sm:$0xff]
      %v1319 = vld [vmem:[%s6 + $0x40] sm:$0xff]
      %v1320 = vld [vmem:[%s6 + $0x48] sm:$0xff]
      %v1321 = vld [vmem:[%s6 + $0x50] sm:$0xff]
      %v1322 = vld [vmem:[%s6 + $0x58] sm:$0xff]
      %v1323 = vld [vmem:[%s6 + $0x60] sm:$0xff]
      %v1324 = vld [vmem:[%s6 + $0x68] sm:$0xff]
      %v1325 = vld [vmem:[%s6 + $0x70] sm:$0xff]
      %v1326 = vld [vmem:[%s6 + $0x78] sm:$0xff]
      %v1327 = vld [vmem:[%s6 + $0x80] sm:$0xff]
      %v1328 = vld [vmem:[%s6 + $0x88] sm:$0xff]
      %v1329 = vld [vmem:[%s6 + $0x90] sm:$0xff]
      %v1330 = vld [vmem:[%s6 + $0x98] sm:$0xff]
      %v1331 = vld [vmem:[%s6 + $0xa0] sm:$0xff]
      %v1332 = vld [vmem:[%s6 + $0xa8] sm:$0xff]
      %v1333 = vld [vmem:[%s6 + $0xb0] sm:$0xff]
      %v1334 = vld [vmem:[%s6 + $0xb8] sm:$0xff]
      %v1335 = vld [vmem:[%s6 + $0xc0] sm:$0xff]
      %v1336 = vld [vmem:[%s6 + $0xc8] sm:$0xff]
      %v1337 = vld [vmem:[%s6 + $0xd0] sm:$0xff]
      %v1338 = vld [vmem:[%s6 + $0xd8] sm:$0xff]
      %v1339 = vld [vmem:[%s6 + $0xe0] sm:$0xff]
      %v1340 = vld [vmem:[%s6 + $0xe8] sm:$0xff]
      %v1341 = vld [vmem:[%s6 + $0xf0] sm:$0xff]
      %v1342 = vld [vmem:[%s6 + $0xf8] sm:$0xff]
      %v1343 = vld [vmem:[%s7] sm:$0x3]
      %v1345 = vlaneseq
      %v1346 = vshrl.u32 %v1345, 7
      %v1347 = vsub.s32 0, %v1346
      %v1348 = vrot.slane %v1343, %v1347
      %v1349 = vlaneseq
      %v1350 = vshrl.u32 %v1349, 7
      %v1351 = vsub.s32 1, %v1350
      %v1352 = vrot.slane %v1343, %v1351
      %v1387 = vunpack.c.l.b16 %v1311
      %v1388 = vunpack.c.h.b16 %v1311
      %v1389 = vunpack.c.l.b16 %v1312
      %v1390 = vunpack.c.h.b16 %v1312
      %v1391 = vunpack.c.l.b16 %v1313
      %v1392 = vunpack.c.h.b16 %v1313
      %v1393 = vunpack.c.l.b16 %v1314
      %v1394 = vunpack.c.h.b16 %v1314
      %v1395 = vunpack.c.l.b16 %v1315
      %v1396 = vunpack.c.h.b16 %v1315
      %v1397 = vunpack.c.l.b16 %v1316
      %v1398 = vunpack.c.h.b16 %v1316
      %v1399 = vunpack.c.l.b16 %v1317
      %v1400 = vunpack.c.h.b16 %v1317
      %v1401 = vunpack.c.l.b16 %v1318
      %v1402 = vunpack.c.h.b16 %v1318
      %v1403 = vunpack.c.l.b16 %v1319
      %v1404 = vunpack.c.h.b16 %v1319
      %v1405 = vunpack.c.l.b16 %v1320
      %v1406 = vunpack.c.h.b16 %v1320
      %v1407 = vunpack.c.l.b16 %v1321
      %v1408 = vunpack.c.h.b16 %v1321
      %v1409 = vunpack.c.l.b16 %v1322
      %v1410 = vunpack.c.h.b16 %v1322
      %v1411 = vunpack.c.l.b16 %v1323
      %v1412 = vunpack.c.h.b16 %v1323
      %v1413 = vunpack.c.l.b16 %v1324
      %v1414 = vunpack.c.h.b16 %v1324
      %v1415 = vunpack.c.l.b16 %v1325
      %v1416 = vunpack.c.h.b16 %v1325
      %v1417 = vunpack.c.l.b16 %v1326
      %v1418 = vunpack.c.h.b16 %v1326
      %v1419 = vunpack.c.l.b16 %v1327
      %v1420 = vunpack.c.h.b16 %v1327
      %v1421 = vunpack.c.l.b16 %v1328
      %v1422 = vunpack.c.h.b16 %v1328
      %v1423 = vunpack.c.l.b16 %v1329
      %v1424 = vunpack.c.h.b16 %v1329
      %v1425 = vunpack.c.l.b16 %v1330
      %v1426 = vunpack.c.h.b16 %v1330
      %v1427 = vunpack.c.l.b16 %v1331
      %v1428 = vunpack.c.h.b16 %v1331
      %v1429 = vunpack.c.l.b16 %v1332
      %v1430 = vunpack.c.h.b16 %v1332
      %v1431 = vunpack.c.l.b16 %v1333
      %v1432 = vunpack.c.h.b16 %v1333
      %v1433 = vunpack.c.l.b16 %v1334
      %v1434 = vunpack.c.h.b16 %v1334
      %v1435 = vunpack.c.l.b16 %v1335
      %v1436 = vunpack.c.h.b16 %v1335
      %v1437 = vunpack.c.l.b16 %v1336
      %v1438 = vunpack.c.h.b16 %v1336
      %v1439 = vunpack.c.l.b16 %v1337
      %v1440 = vunpack.c.h.b16 %v1337
      %v1441 = vunpack.c.l.b16 %v1338
      %v1442 = vunpack.c.h.b16 %v1338
      %v1443 = vunpack.c.l.b16 %v1339
      %v1444 = vunpack.c.h.b16 %v1339
      %v1445 = vunpack.c.l.b16 %v1340
      %v1446 = vunpack.c.h.b16 %v1340
      %v1447 = vunpack.c.l.b16 %v1341
      %v1448 = vunpack.c.h.b16 %v1341
      %v1449 = vunpack.c.l.b16 %v1342
      %v1450 = vunpack.c.h.b16 %v1342
      %v1451 = vpack.c.b16 %v1389, %v1387
      %v1452 = vpack.c.b16 %v1390, %v1388
      %v1453 = vpack.c.b16 %v1393, %v1391
      %v1454 = vpack.c.b16 %v1394, %v1392
      %v1455 = vpack.c.b16 %v1397, %v1395
      %v1456 = vpack.c.b16 %v1398, %v1396
      %v1457 = vpack.c.b16 %v1401, %v1399
      %v1458 = vpack.c.b16 %v1402, %v1400
      %v1459 = vpack.c.b16 %v1405, %v1403
      %v1460 = vpack.c.b16 %v1406, %v1404
      %v1461 = vpack.c.b16 %v1409, %v1407
      %v1462 = vpack.c.b16 %v1410, %v1408
      %v1463 = vpack.c.b16 %v1413, %v1411
      %v1464 = vpack.c.b16 %v1414, %v1412
      %v1465 = vpack.c.b16 %v1417, %v1415
      %v1466 = vpack.c.b16 %v1418, %v1416
      %v1467 = vpack.c.b16 %v1421, %v1419
      %v1468 = vpack.c.b16 %v1422, %v1420
      %v1469 = vpack.c.b16 %v1425, %v1423
      %v1470 = vpack.c.b16 %v1426, %v1424
      %v1471 = vpack.c.b16 %v1429, %v1427
      %v1472 = vpack.c.b16 %v1430, %v1428
      %v1473 = vpack.c.b16 %v1433, %v1431
      %v1474 = vpack.c.b16 %v1434, %v1432
      %v1475 = vpack.c.b16 %v1437, %v1435
      %v1476 = vpack.c.b16 %v1438, %v1436
      %v1477 = vpack.c.b16 %v1441, %v1439
      %v1478 = vpack.c.b16 %v1442, %v1440
      %v1479 = vpack.c.b16 %v1445, %v1443
      %v1480 = vpack.c.b16 %v1446, %v1444
      %v1481 = vpack.c.b16 %v1449, %v1447
      %v1482 = vpack.c.b16 %v1450, %v1448
      %1515 = vmatprep.subr.bf16.mxu0 %v1452
      %1516 = vmatpush1.bf16.msra.mxu0 %v1451
      %1517 = vmatprep.subr.bf16.mxu0 %v1454
      %1518 = vmatpush1.bf16.msra.mxu0 %v1453
      %1519 = vmatprep.subr.bf16.mxu0 %v1456
      %1520 = vmatpush1.bf16.msra.mxu0 %v1455
      %1521 = vmatprep.subr.bf16.mxu0 %v1458
      %1522 = vmatpush1.bf16.msra.mxu0 %v1457
      %1523 = vmatprep.subr.bf16.mxu0 %v1460
      %1524 = vmatpush1.bf16.msra.mxu0 %v1459
      %1525 = vmatprep.subr.bf16.mxu0 %v1462
      %1526 = vmatpush1.bf16.msra.mxu0 %v1461
      %1527 = vmatprep.subr.bf16.mxu0 %v1464
      %1528 = vmatpush1.bf16.msra.mxu0 %v1463
      %1529 = vmatprep.subr.bf16.mxu0 %v1466
      %1530 = vmatpush1.bf16.msra.mxu0 %v1465
      %1531 = vmatprep.subr.bf16.mxu0 %v1468
      %1532 = vmatpush1.bf16.msra.mxu0 %v1467
      %1533 = vmatprep.subr.bf16.mxu0 %v1470
      %1534 = vmatpush1.bf16.msra.mxu0 %v1469
      %1535 = vmatprep.subr.bf16.mxu0 %v1472
      %1536 = vmatpush1.bf16.msra.mxu0 %v1471
      %1537 = vmatprep.subr.bf16.mxu0 %v1474
      %1538 = vmatpush1.bf16.msra.mxu0 %v1473
      %1539 = vmatprep.subr.bf16.mxu0 %v1476
      %1540 = vmatpush1.bf16.msra.mxu0 %v1475
      %1541 = vmatprep.subr.bf16.mxu0 %v1478
      %1542 = vmatpush1.bf16.msra.mxu0 %v1477
      %1543 = vmatprep.subr.bf16.mxu0 %v1480
      %1544 = vmatpush1.bf16.msra.mxu0 %v1479
      %1545 = vmatprep.subr.bf16.mxu0 %v1482
      %1546 = vmatpush1.bf16.msra.mxu0 %v1481
      %1547 = vmatprep.mubr.bf16.mxu0 %v1280
      %1548 = vmatmul.mubr.bf16.gmra.mrb[0].mxu0 %v1279
      %v1549 = vpop.f32.mrb[0].mxu0
      %v1550 = vadd.f32 %v1348, %v1549
      %v1551 = vpop.f32.mrb[0].mxu0
      %v1552 = vadd.f32 %v1352, %v1551
      %v1553 = vpop.f32.mrb[0].mxu0
      %v1554 = vadd.f32 %v1348, %v1553
      %v1555 = vpop.f32.mrb[0].mxu0
      %v1556 = vadd.f32 %v1352, %v1555
      %1557 = vmatprep.mubr.bf16.mxu0 %v1282
      %1558 = vmatmul.mubr.bf16.gmra.mrb[0].mxu0 %v1281
      %v1559 = vpop.f32.mrb[0].mxu0
      %v1560 = vadd.f32 %v1348, %v1559
      %v1561 = vpop.f32.mrb[0].mxu0
      %v1562 = vadd.f32 %v1352, %v1561
      %v1563 = vpop.f32.mrb[0].mxu0
      %v1564 = vadd.f32 %v1348, %v1563
      %v1565 = vpop.f32.mrb[0].mxu0
      %v1566 = vadd.f32 %v1352, %v1565
      %1567 = vmatprep.mubr.bf16.mxu0 %v1284
      %1568 = vmatmul.mubr.bf16.gmra.mrb[0].mxu0 %v1283
      %v1569 = vpop.f32.mrb[0].mxu0
      %v1570 = vadd.f32 %v1348, %v1569
      %v1571 = vpop.f32.mrb[0].mxu0
      %v1572 = vadd.f32 %v1352, %v1571
      %v1573 = vpop.f32.mrb[0].mxu0
      %v1574 = vadd.f32 %v1348, %v1573
      %v1575 = vpop.f32.mrb[0].mxu0
      %v1576 = vadd.f32 %v1352, %v1575
      %1577 = vmatprep.mubr.bf16.mxu0 %v1286
      %1578 = vmatmul.mubr.bf16.gmra.mrb[0].mxu0 %v1285
      %v1579 = vpop.f32.mrb[0].mxu0
      %v1580 = vadd.f32 %v1348, %v1579
      %v1581 = vpop.f32.mrb[0].mxu0
      %v1582 = vadd.f32 %v1352, %v1581
      %v1583 = vpop.f32.mrb[0].mxu0
      %v1584 = vadd.f32 %v1348, %v1583
      %v1585 = vpop.f32.mrb[0].mxu0
      %v1586 = vadd.f32 %v1352, %v1585
      %1587 = vmatprep.mubr.bf16.mxu0 %v1288
      %1588 = vmatmul.mubr.bf16.gmra.mrb[0].mxu0 %v1287
      %v1589 = vpop.f32.mrb[0].mxu0
      %v1590 = vadd.f32 %v1348, %v1589
      %v1591 = vpop.f32.mrb[0].mxu0
      %v1592 = vadd.f32 %v1352, %v1591
      %v1593 = vpop.f32.mrb[0].mxu0
      %v1594 = vadd.f32 %v1348, %v1593
      %v1595 = vpop.f32.mrb[0].mxu0
      %v1596 = vadd.f32 %v1352, %v1595
      %1597 = vmatprep.mubr.bf16.mxu0 %v1290
      %1598 = vmatmul.mubr.bf16.gmra.mrb[0].mxu0 %v1289
      %v1599 = vpop.f32.mrb[0].mxu0
      %v1600 = vadd.f32 %v1348, %v1599
      %v1601 = vpop.f32.mrb[0].mxu0
      %v1602 = vadd.f32 %v1352, %v1601
      %v1603 = vpop.f32.mrb[0].mxu0
      %v1604 = vadd.f32 %v1348, %v1603
      %v1605 = vpop.f32.mrb[0].mxu0
      %v1606 = vadd.f32 %v1352, %v1605
      %1607 = vmatprep.mubr.bf16.mxu0 %v1292
      %1608 = vmatmul.mubr.bf16.gmra.mrb[0].mxu0 %v1291
      %v1609 = vpop.f32.mrb[0].mxu0
      %v1610 = vadd.f32 %v1348, %v1609
      %v1611 = vpop.f32.mrb[0].mxu0
      %v1612 = vadd.f32 %v1352, %v1611
      %v1613 = vpop.f32.mrb[0].mxu0
      %v1614 = vadd.f32 %v1348, %v1613
      %v1615 = vpop.f32.mrb[0].mxu0
      %v1616 = vadd.f32 %v1352, %v1615
      %1617 = vmatprep.mubr.bf16.mxu0 %v1294
      %1618 = vmatmul.mubr.bf16.gmra.mrb[0].mxu0 %v1293
      %v1619 = vpop.f32.mrb[0].mxu0
      %v1620 = vadd.f32 %v1348, %v1619
      %v1621 = vpop.f32.mrb[0].mxu0
      %v1622 = vadd.f32 %v1352, %v1621
      %v1623 = vpop.f32.mrb[0].mxu0
      %v1624 = vadd.f32 %v1348, %v1623
      %v1625 = vpop.f32.mrb[0].mxu0
      %v1626 = vadd.f32 %v1352, %v1625
      %1627 = vmatprep.mubr.bf16.mxu0 %v1296
      %1628 = vmatmul.mubr.bf16.gmra.mrb[0].mxu0 %v1295
      %v1629 = vpop.f32.mrb[0].mxu0
      %v1630 = vadd.f32 %v1348, %v1629
      %v1631 = vpop.f32.mrb[0].mxu0
      %v1632 = vadd.f32 %v1352, %v1631
      %v1633 = vpop.f32.mrb[0].mxu0
      %v1634 = vadd.f32 %v1348, %v1633
      %v1635 = vpop.f32.mrb[0].mxu0
      %v1636 = vadd.f32 %v1352, %v1635
      %1637 = vmatprep.mubr.bf16.mxu0 %v1298
      %1638 = vmatmul.mubr.bf16.gmra.mrb[0].mxu0 %v1297
      %v1639 = vpop.f32.mrb[0].mxu0
      %v1640 = vadd.f32 %v1348, %v1639
      %v1641 = vpop.f32.mrb[0].mxu0
      %v1642 = vadd.f32 %v1352, %v1641
      %v1643 = vpop.f32.mrb[0].mxu0
      %v1644 = vadd.f32 %v1348, %v1643
      %v1645 = vpop.f32.mrb[0].mxu0
      %v1646 = vadd.f32 %v1352, %v1645
      %1647 = vmatprep.mubr.bf16.mxu0 %v1300
      %1648 = vmatmul.mubr.bf16.gmra.mrb[0].mxu0 %v1299
      %v1649 = vpop.f32.mrb[0].mxu0
      %v1650 = vadd.f32 %v1348, %v1649
      %v1651 = vpop.f32.mrb[0].mxu0
      %v1652 = vadd.f32 %v1352, %v1651
      %v1653 = vpop.f32.mrb[0].mxu0
      %v1654 = vadd.f32 %v1348, %v1653
      %v1655 = vpop.f32.mrb[0].mxu0
      %v1656 = vadd.f32 %v1352, %v1655
      %1657 = vmatprep.mubr.bf16.mxu0 %v1302
      %1658 = vmatmul.mubr.bf16.gmra.mrb[0].mxu0 %v1301
      %v1659 = vpop.f32.mrb[0].mxu0
      %v1660 = vadd.f32 %v1348, %v1659
      %v1661 = vpop.f32.mrb[0].mxu0
      %v1662 = vadd.f32 %v1352, %v1661
      %v1663 = vpop.f32.mrb[0].mxu0
      %v1664 = vadd.f32 %v1348, %v1663
      %v1665 = vpop.f32.mrb[0].mxu0
      %v1666 = vadd.f32 %v1352, %v1665
      %1667 = vmatprep.mubr.bf16.mxu0 %v1304
      %1668 = vmatmul.mubr.bf16.gmra.mrb[0].mxu0 %v1303
      %v1669 = vpop.f32.mrb[0].mxu0
      %v1670 = vadd.f32 %v1348, %v1669
      %v1671 = vpop.f32.mrb[0].mxu0
      %v1672 = vadd.f32 %v1352, %v1671
      %v1673 = vpop.f32.mrb[0].mxu0
      %v1674 = vadd.f32 %v1348, %v1673
      %v1675 = vpop.f32.mrb[0].mxu0
      %v1676 = vadd.f32 %v1352, %v1675
      %1677 = vmatprep.mubr.bf16.mxu0 %v1306
      %1678 = vmatmul.mubr.bf16.gmra.mrb[0].mxu0 %v1305
      %v1679 = vpop.f32.mrb[0].mxu0
      %v1680 = vadd.f32 %v1348, %v1679
      %v1681 = vpop.f32.mrb[0].mxu0
      %v1682 = vadd.f32 %v1352, %v1681
      %v1683 = vpop.f32.mrb[0].mxu0
      %v1684 = vadd.f32 %v1348, %v1683
      %v1685 = vpop.f32.mrb[0].mxu0
      %v1686 = vadd.f32 %v1352, %v1685
      %1687 = vmatprep.mubr.bf16.mxu0 %v1308
      %1688 = vmatmul.mubr.bf16.gmra.mrb[0].mxu0 %v1307
      %v1689 = vpop.f32.mrb[0].mxu0
      %v1690 = vadd.f32 %v1348, %v1689
      %v1691 = vpop.f32.mrb[0].mxu0
      %v1692 = vadd.f32 %v1352, %v1691
      %v1693 = vpop.f32.mrb[0].mxu0
      %v1694 = vadd.f32 %v1348, %v1693
      %v1695 = vpop.f32.mrb[0].mxu0
      %v1696 = vadd.f32 %v1352, %v1695
      %1697 = vmatprep.mubr.bf16.mxu0 %v1310
      %1698 = vmatmul.mubr.bf16.gmra.mrb[0].mxu0 %v1309
      %v1699 = vpop.f32.mrb[0].mxu0
      %v1700 = vadd.f32 %v1348, %v1699
      %v1701 = vpop.f32.mrb[0].mxu0
      %v1702 = vadd.f32 %v1352, %v1701
      %v1703 = vpop.f32.mrb[0].mxu0
      %v1704 = vadd.f32 %v1348, %v1703
      %v1705 = vpop.f32.mrb[0].mxu0
      %v1706 = vadd.f32 %v1352, %v1705
      %1707 = vdwg.mxu0
      %v1708 = vmax.f32 %v1550, 0.0
      %v1709 = vmax.f32 %v1552, 0.0
      %v1710 = vmax.f32 %v1554, 0.0
      %v1711 = vmax.f32 %v1556, 0.0
      %v1712 = vmax.f32 %v1560, 0.0
      %v1713 = vmax.f32 %v1562, 0.0
      %v1714 = vmax.f32 %v1564, 0.0
      %v1715 = vmax.f32 %v1566, 0.0
      %v1716 = vmax.f32 %v1570, 0.0
      %v1717 = vmax.f32 %v1572, 0.0
      %v1718 = vmax.f32 %v1574, 0.0
      %v1719 = vmax.f32 %v1576, 0.0
      %v1720 = vmax.f32 %v1580, 0.0
      %v1721 = vmax.f32 %v1582, 0.0
      %v1722 = vmax.f32 %v1584, 0.0
      %v1723 = vmax.f32 %v1586, 0.0
      %v1724 = vmax.f32 %v1590, 0.0
      %v1725 = vmax.f32 %v1592, 0.0
      %v1726 = vmax.f32 %v1594, 0.0
      %v1727 = vmax.f32 %v1596, 0.0
      %v1728 = vmax.f32 %v1600, 0.0
      %v1729 = vmax.f32 %v1602, 0.0
      %v1730 = vmax.f32 %v1604, 0.0
      %v1731 = vmax.f32 %v1606, 0.0
      %v1732 = vmax.f32 %v1610, 0.0
      %v1733 = vmax.f32 %v1612, 0.0
      %v1734 = vmax.f32 %v1614, 0.0
      %v1735 = vmax.f32 %v1616, 0.0
      %v1736 = vmax.f32 %v1620, 0.0
      %v1737 = vmax.f32 %v1622, 0.0
      %v1738 = vmax.f32 %v1624, 0.0
      %v1739 = vmax.f32 %v1626, 0.0
      %v1740 = vmax.f32 %v1630, 0.0
      %v1741 = vmax.f32 %v1632, 0.0
      %v1742 = vmax.f32 %v1634, 0.0
      %v1743 = vmax.f32 %v1636, 0.0
      %v1744 = vmax.f32 %v1640, 0.0
      %v1745 = vmax.f32 %v1642, 0.0
      %v1746 = vmax.f32 %v1644, 0.0
      %v1747 = vmax.f32 %v1646, 0.0
      %v1748 = vmax.f32 %v1650, 0.0
      %v1749 = vmax.f32 %v1652, 0.0
      %v1750 = vmax.f32 %v1654, 0.0
      %v1751 = vmax.f32 %v1656, 0.0
      %v1752 = vmax.f32 %v1660, 0.0
      %v1753 = vmax.f32 %v1662, 0.0
      %v1754 = vmax.f32 %v1664, 0.0
      %v1755 = vmax.f32 %v1666, 0.0
      %v1756 = vmax.f32 %v1670, 0.0
      %v1757 = vmax.f32 %v1672, 0.0
      %v1758 = vmax.f32 %v1674, 0.0
      %v1759 = vmax.f32 %v1676, 0.0
      %v1760 = vmax.f32 %v1680, 0.0
      %v1761 = vmax.f32 %v1682, 0.0
      %v1762 = vmax.f32 %v1684, 0.0
      %v1763 = vmax.f32 %v1686, 0.0
      %v1764 = vmax.f32 %v1690, 0.0
      %v1765 = vmax.f32 %v1692, 0.0
      %v1766 = vmax.f32 %v1694, 0.0
      %v1767 = vmax.f32 %v1696, 0.0
      %v1768 = vmax.f32 %v1700, 0.0
      %v1769 = vmax.f32 %v1702, 0.0
      %v1770 = vmax.f32 %v1704, 0.0
      %v1771 = vmax.f32 %v1706, 0.0
      %v1772 = vpack.c.bf16 %v1710, %v1708
      %v1773 = vpack.c.bf16 %v1711, %v1709
      %v1774 = vpack.c.bf16 %v1714, %v1712
      %v1775 = vpack.c.bf16 %v1715, %v1713
      %v1776 = vpack.c.bf16 %v1718, %v1716
      %v1777 = vpack.c.bf16 %v1719, %v1717
      %v1778 = vpack.c.bf16 %v1722, %v1720
      %v1779 = vpack.c.bf16 %v1723, %v1721
      %v1780 = vpack.c.bf16 %v1726, %v1724
      %v1781 = vpack.c.bf16 %v1727, %v1725
      %v1782 = vpack.c.bf16 %v1730, %v1728
      %v1783 = vpack.c.bf16 %v1731, %v1729
      %v1784 = vpack.c.bf16 %v1734, %v1732
      %v1785 = vpack.c.bf16 %v1735, %v1733
      %v1786 = vpack.c.bf16 %v1738, %v1736
      %v1787 = vpack.c.bf16 %v1739, %v1737
      %v1788 = vpack.c.bf16 %v1742, %v1740
      %v1789 = vpack.c.bf16 %v1743, %v1741
      %v1790 = vpack.c.bf16 %v1746, %v1744
      %v1791 = vpack.c.bf16 %v1747, %v1745
      %v1792 = vpack.c.bf16 %v1750, %v1748
      %v1793 = vpack.c.bf16 %v1751, %v1749
      %v1794 = vpack.c.bf16 %v1754, %v1752
      %v1795 = vpack.c.bf16 %v1755, %v1753
      %v1796 = vpack.c.bf16 %v1758, %v1756
      %v1797 = vpack.c.bf16 %v1759, %v1757
      %v1798 = vpack.c.bf16 %v1762, %v1760
      %v1799 = vpack.c.bf16 %v1763, %v1761
      %v1800 = vpack.c.bf16 %v1766, %v1764
      %v1801 = vpack.c.bf16 %v1767, %v1765
      %v1802 = vpack.c.bf16 %v1770, %v1768
      %v1803 = vpack.c.bf16 %v1771, %v1769
      %v1804 = vld [vmem:[%s8] sm:$0xf]
      %v1805 = vld [vmem:[%s8 + $0x4] sm:$0xf]
      %v1806 = vld [vmem:[%s8 + $0x8] sm:$0xf]
      %v1807 = vld [vmem:[%s8 + $0xc] sm:$0xf]
      %v1808 = vld [vmem:[%s8 + $0x10] sm:$0xf]
      %v1809 = vld [vmem:[%s8 + $0x14] sm:$0xf]
      %v1810 = vld [vmem:[%s8 + $0x18] sm:$0xf]
      %v1811 = vld [vmem:[%s8 + $0x1c] sm:$0xf]
      %v1812 = vld [vmem:[%s8 + $0x20] sm:$0xf]
      %v1813 = vld [vmem:[%s8 + $0x24] sm:$0xf]
      %v1814 = vld [vmem:[%s8 + $0x28] sm:$0xf]
      %v1815 = vld [vmem:[%s8 + $0x2c] sm:$0xf]
      %v1816 = vld [vmem:[%s8 + $0x30] sm:$0xf]
      %v1817 = vld [vmem:[%s8 + $0x34] sm:$0xf]
      %v1818 = vld [vmem:[%s8 + $0x38] sm:$0xf]
      %v1819 = vld [vmem:[%s8 + $0x3c] sm:$0xf]
      %v1820 = vld [vmem:[%s8 + $0x40] sm:$0xf]
      %v1821 = vld [vmem:[%s8 + $0x44] sm:$0xf]
      %v1822 = vld [vmem:[%s8 + $0x48] sm:$0xf]
      %v1823 = vld [vmem:[%s8 + $0x4c] sm:$0xf]
      %v1824 = vld [vmem:[%s8 + $0x50] sm:$0xf]
      %v1825 = vld [vmem:[%s8 + $0x54] sm:$0xf]
      %v1826 = vld [vmem:[%s8 + $0x58] sm:$0xf]
      %v1827 = vld [vmem:[%s8 + $0x5c] sm:$0xf]
      %v1828 = vld [vmem:[%s8 + $0x60] sm:$0xf]
      %v1829 = vld [vmem:[%s8 + $0x64] sm:$0xf]
      %v1830 = vld [vmem:[%s8 + $0x68] sm:$0xf]
      %v1831 = vld [vmem:[%s8 + $0x6c] sm:$0xf]
      %v1832 = vld [vmem:[%s8 + $0x70] sm:$0xf]
      %v1833 = vld [vmem:[%s8 + $0x74] sm:$0xf]
      %v1834 = vld [vmem:[%s8 + $0x78] sm:$0xf]
      %v1835 = vld [vmem:[%s8 + $0x7c] sm:$0xf]
      %v1836 = vld [vmem:[%s9] sm:$0x1]
      %v1838 = vlaneseq
      %v1839 = vshrl.u32 %v1838, 7
      %v1840 = vsub.s32 0, %v1839
      %v1841 = vrot.slane %v1836, %v1840
      %v1875 = vunpack.c.l.b16 %v1804
      %v1876 = vunpack.c.l.b16 %v1805
      %v1877 = vunpack.c.l.b16 %v1806
      %v1878 = vunpack.c.l.b16 %v1807
      %v1879 = vunpack.c.l.b16 %v1808
      %v1880 = vunpack.c.l.b16 %v1809
      %v1881 = vunpack.c.l.b16 %v1810
      %v1882 = vunpack.c.l.b16 %v1811
      %v1883 = vunpack.c.l.b16 %v1812
      %v1884 = vunpack.c.l.b16 %v1813
      %v1885 = vunpack.c.l.b16 %v1814
      %v1886 = vunpack.c.l.b16 %v1815
      %v1887 = vunpack.c.l.b16 %v1816
      %v1888 = vunpack.c.l.b16 %v1817
      %v1889 = vunpack.c.l.b16 %v1818
      %v1890 = vunpack.c.l.b16 %v1819
      %v1891 = vunpack.c.l.b16 %v1820
      %v1892 = vunpack.c.l.b16 %v1821
      %v1893 = vunpack.c.l.b16 %v1822
      %v1894 = vunpack.c.l.b16 %v1823
      %v1895 = vunpack.c.l.b16 %v1824
      %v1896 = vunpack.c.l.b16 %v1825
      %v1897 = vunpack.c.l.b16 %v1826
      %v1898 = vunpack.c.l.b16 %v1827
      %v1899 = vunpack.c.l.b16 %v1828
      %v1900 = vunpack.c.l.b16 %v1829
      %v1901 = vunpack.c.l.b16 %v1830
      %v1902 = vunpack.c.l.b16 %v1831
      %v1903 = vunpack.c.l.b16 %v1832
      %v1904 = vunpack.c.l.b16 %v1833
      %v1905 = vunpack.c.l.b16 %v1834
      %v1906 = vunpack.c.l.b16 %v1835
      %v1907 = vpack.c.b16 %v1876, %v1875
      %v1908 = vpack.c.b16 %v1878, %v1877
      %v1909 = vpack.c.b16 %v1880, %v1879
      %v1910 = vpack.c.b16 %v1882, %v1881
      %v1911 = vpack.c.b16 %v1884, %v1883
      %v1912 = vpack.c.b16 %v1886, %v1885
      %v1913 = vpack.c.b16 %v1888, %v1887
      %v1914 = vpack.c.b16 %v1890, %v1889
      %v1915 = vpack.c.b16 %v1892, %v1891
      %v1916 = vpack.c.b16 %v1894, %v1893
      %v1917 = vpack.c.b16 %v1896, %v1895
      %v1918 = vpack.c.b16 %v1898, %v1897
      %v1919 = vpack.c.b16 %v1900, %v1899
      %v1920 = vpack.c.b16 %v1902, %v1901
      %v1921 = vpack.c.b16 %v1904, %v1903
      %v1922 = vpack.c.b16 %v1906, %v1905
      %1939 = vmatprep.subr.bf16.mxu0 0
      %1940 = vmatpush1.bf16.msra.mxu0 %v1907
      %1941 = vmatprep.subr.bf16.mxu0 0
      %1942 = vmatpush1.bf16.msra.mxu0 %v1908
      %1943 = vmatprep.subr.bf16.mxu0 0
      %1944 = vmatpush1.bf16.msra.mxu0 %v1909
      %1945 = vmatprep.subr.bf16.mxu0 0
      %1946 = vmatpush1.bf16.msra.mxu0 %v1910
      %1947 = vmatprep.subr.bf16.mxu0 0
      %1948 = vmatpush1.bf16.msra.mxu0 %v1911
      %1949 = vmatprep.subr.bf16.mxu0 0
      %1950 = vmatpush1.bf16.msra.mxu0 %v1912
      %1951 = vmatprep.subr.bf16.mxu0 0
      %1952 = vmatpush1.bf16.msra.mxu0 %v1913
      %1953 = vmatprep.subr.bf16.mxu0 0
      %1954 = vmatpush1.bf16.msra.mxu0 %v1914
      %1955 = vmatprep.subr.bf16.mxu0 0
      %1956 = vmatpush1.bf16.msra.mxu0 %v1915
      %1957 = vmatprep.subr.bf16.mxu0 0
      %1958 = vmatpush1.bf16.msra.mxu0 %v1916
      %1959 = vmatprep.subr.bf16.mxu0 0
      %1960 = vmatpush1.bf16.msra.mxu0 %v1917
      %1961 = vmatprep.subr.bf16.mxu0 0
      %1962 = vmatpush1.bf16.msra.mxu0 %v1918
      %1963 = vmatprep.subr.bf16.mxu0 0
      %1964 = vmatpush1.bf16.msra.mxu0 %v1919
      %1965 = vmatprep.subr.bf16.mxu0 0
      %1966 = vmatpush1.bf16.msra.mxu0 %v1920
      %1967 = vmatprep.subr.bf16.mxu0 0
      %1968 = vmatpush1.bf16.msra.mxu0 %v1921
      %1969 = vmatprep.subr.bf16.mxu0 0
      %1970 = vmatpush1.bf16.msra.mxu0 %v1922
      %1971 = vmatprep.mubr.bf16.mxu0 %v1773
      %1972 = vmatmul.mubr.bf16.gmra.mrb[0].mxu0 %v1772
      %v1973 = vpop.f32.mrb[0].mxu0
      %v1974 = vadd.f32 %v1841, %v1973
      %v1975 = vpop.f32.mrb[0].mxu0
      %v1976 = vpop.f32.mrb[0].mxu0
      %v1977 = vadd.f32 %v1841, %v1976
      %v1978 = vpop.f32.mrb[0].mxu0
      %1979 = vmatprep.mubr.bf16.mxu0 %v1775
      %1980 = vmatmul.mubr.bf16.gmra.mrb[0].mxu0 %v1774
      %v1981 = vpop.f32.mrb[0].mxu0
      %v1982 = vadd.f32 %v1841, %v1981
      %v1983 = vpop.f32.mrb[0].mxu0
      %v1984 = vpop.f32.mrb[0].mxu0
      %v1985 = vadd.f32 %v1841, %v1984
      %v1986 = vpop.f32.mrb[0].mxu0
      %1987 = vmatprep.mubr.bf16.mxu0 %v1777
      %1988 = vmatmul.mubr.bf16.gmra.mrb[0].mxu0 %v1776
      %v1989 = vpop.f32.mrb[0].mxu0
      %v1990 = vadd.f32 %v1841, %v1989
      %v1991 = vpop.f32.mrb[0].mxu0
      %v1992 = vpop.f32.mrb[0].mxu0
      %v1993 = vadd.f32 %v1841, %v1992
      %v1994 = vpop.f32.mrb[0].mxu0
      %1995 = vmatprep.mubr.bf16.mxu0 %v1779
      %1996 = vmatmul.mubr.bf16.gmra.mrb[0].mxu0 %v1778
      %v1997 = vpop.f32.mrb[0].mxu0
      %v1998 = vadd.f32 %v1841, %v1997
      %v1999 = vpop.f32.mrb[0].mxu0
      %v2000 = vpop.f32.mrb[0].mxu0
      %v2001 = vadd.f32 %v1841, %v2000
      %v2002 = vpop.f32.mrb[0].mxu0
      %2003 = vmatprep.mubr.bf16.mxu0 %v1781
      %2004 = vmatmul.mubr.bf16.gmra.mrb[0].mxu0 %v1780
      %v2005 = vpop.f32.mrb[0].mxu0
      %v2006 = vadd.f32 %v1841, %v2005
      %v2007 = vpop.f32.mrb[0].mxu0
      %v2008 = vpop.f32.mrb[0].mxu0
      %v2009 = vadd.f32 %v1841, %v2008
      %v2010 = vpop.f32.mrb[0].mxu0
      %2011 = vmatprep.mubr.bf16.mxu0 %v1783
      %2012 = vmatmul.mubr.bf16.gmra.mrb[0].mxu0 %v1782
      %v2013 = vpop.f32.mrb[0].mxu0
      %v2014 = vadd.f32 %v1841, %v2013
      %v2015 = vpop.f32.mrb[0].mxu0
      %v2016 = vpop.f32.mrb[0].mxu0
      %v2017 = vadd.f32 %v1841, %v2016
      %v2018 = vpop.f32.mrb[0].mxu0
      %2019 = vmatprep.mubr.bf16.mxu0 %v1785
      %2020 = vmatmul.mubr.bf16.gmra.mrb[0].mxu0 %v1784
      %v2021 = vpop.f32.mrb[0].mxu0
      %v2022 = vadd.f32 %v1841, %v2021
      %v2023 = vpop.f32.mrb[0].mxu0
      %v2024 = vpop.f32.mrb[0].mxu0
      %v2025 = vadd.f32 %v1841, %v2024
      %v2026 = vpop.f32.mrb[0].mxu0
      %2027 = vmatprep.mubr.bf16.mxu0 %v1787
      %2028 = vmatmul.mubr.bf16.gmra.mrb[0].mxu0 %v1786
      %v2029 = vpop.f32.mrb[0].mxu0
      %v2030 = vadd.f32 %v1841, %v2029
      %v2031 = vpop.f32.mrb[0].mxu0
      %v2032 = vpop.f32.mrb[0].mxu0
      %v2033 = vadd.f32 %v1841, %v2032
      %v2034 = vpop.f32.mrb[0].mxu0
      %2035 = vmatprep.mubr.bf16.mxu0 %v1789
      %2036 = vmatmul.mubr.bf16.gmra.mrb[0].mxu0 %v1788
      %v2037 = vpop.f32.mrb[0].mxu0
      %v2038 = vadd.f32 %v1841, %v2037
      %v2039 = vpop.f32.mrb[0].mxu0
      %v2040 = vpop.f32.mrb[0].mxu0
      %v2041 = vadd.f32 %v1841, %v2040
      %v2042 = vpop.f32.mrb[0].mxu0
      %2043 = vmatprep.mubr.bf16.mxu0 %v1791
      %2044 = vmatmul.mubr.bf16.gmra.mrb[0].mxu0 %v1790
      %v2045 = vpop.f32.mrb[0].mxu0
      %v2046 = vadd.f32 %v1841, %v2045
      %v2047 = vpop.f32.mrb[0].mxu0
      %v2048 = vpop.f32.mrb[0].mxu0
      %v2049 = vadd.f32 %v1841, %v2048
      %v2050 = vpop.f32.mrb[0].mxu0
      %2051 = vmatprep.mubr.bf16.mxu0 %v1793
      %2052 = vmatmul.mubr.bf16.gmra.mrb[0].mxu0 %v1792
      %v2053 = vpop.f32.mrb[0].mxu0
      %v2054 = vadd.f32 %v1841, %v2053
      %v2055 = vpop.f32.mrb[0].mxu0
      %v2056 = vpop.f32.mrb[0].mxu0
      %v2057 = vadd.f32 %v1841, %v2056
      %v2058 = vpop.f32.mrb[0].mxu0
      %2059 = vmatprep.mubr.bf16.mxu0 %v1795
      %2060 = vmatmul.mubr.bf16.gmra.mrb[0].mxu0 %v1794
      %v2061 = vpop.f32.mrb[0].mxu0
      %v2062 = vadd.f32 %v1841, %v2061
      %v2063 = vpop.f32.mrb[0].mxu0
      %v2064 = vpop.f32.mrb[0].mxu0
      %v2065 = vadd.f32 %v1841, %v2064
      %v2066 = vpop.f32.mrb[0].mxu0
      %2067 = vmatprep.mubr.bf16.mxu0 %v1797
      %2068 = vmatmul.mubr.bf16.gmra.mrb[0].mxu0 %v1796
      %v2069 = vpop.f32.mrb[0].mxu0
      %v2070 = vadd.f32 %v1841, %v2069
      %v2071 = vpop.f32.mrb[0].mxu0
      %v2072 = vpop.f32.mrb[0].mxu0
      %v2073 = vadd.f32 %v1841, %v2072
      %v2074 = vpop.f32.mrb[0].mxu0
      %2075 = vmatprep.mubr.bf16.mxu0 %v1799
      %2076 = vmatmul.mubr.bf16.gmra.mrb[0].mxu0 %v1798
      %v2077 = vpop.f32.mrb[0].mxu0
      %v2078 = vadd.f32 %v1841, %v2077
      %v2079 = vpop.f32.mrb[0].mxu0
      %v2080 = vpop.f32.mrb[0].mxu0
      %v2081 = vadd.f32 %v1841, %v2080
      %v2082 = vpop.f32.mrb[0].mxu0
      %2083 = vmatprep.mubr.bf16.mxu0 %v1801
      %2084 = vmatmul.mubr.bf16.gmra.mrb[0].mxu0 %v1800
      %v2085 = vpop.f32.mrb[0].mxu0
      %v2086 = vadd.f32 %v1841, %v2085
      %v2087 = vpop.f32.mrb[0].mxu0
      %v2088 = vpop.f32.mrb[0].mxu0
      %v2089 = vadd.f32 %v1841, %v2088
      %v2090 = vpop.f32.mrb[0].mxu0
      %2091 = vmatprep.mubr.bf16.mxu0 %v1803
      %2092 = vmatmul.mubr.bf16.gmra.mrb[0].mxu0 %v1802
      %v2093 = vpop.f32.mrb[0].mxu0
      %v2094 = vadd.f32 %v1841, %v2093
      %v2095 = vpop.f32.mrb[0].mxu0
      %v2096 = vpop.f32.mrb[0].mxu0
      %v2097 = vadd.f32 %v1841, %v2096
      %v2098 = vpop.f32.mrb[0].mxu0
      %2099 = vdwg.mxu0
      %v2100 = vmax.f32 %v1974, 0.0
      %v2101 = vmax.f32 %v1977, 0.0
      %v2102 = vmax.f32 %v1982, 0.0
      %v2103 = vmax.f32 %v1985, 0.0
      %v2104 = vmax.f32 %v1990, 0.0
      %v2105 = vmax.f32 %v1993, 0.0
      %v2106 = vmax.f32 %v1998, 0.0
      %v2107 = vmax.f32 %v2001, 0.0
      %v2108 = vmax.f32 %v2006, 0.0
      %v2109 = vmax.f32 %v2009, 0.0
      %v2110 = vmax.f32 %v2014, 0.0
      %v2111 = vmax.f32 %v2017, 0.0
      %v2112 = vmax.f32 %v2022, 0.0
      %v2113 = vmax.f32 %v2025, 0.0
      %v2114 = vmax.f32 %v2030, 0.0
      %v2115 = vmax.f32 %v2033, 0.0
      %v2116 = vmax.f32 %v2038, 0.0
      %v2117 = vmax.f32 %v2041, 0.0
      %v2118 = vmax.f32 %v2046, 0.0
      %v2119 = vmax.f32 %v2049, 0.0
      %v2120 = vmax.f32 %v2054, 0.0
      %v2121 = vmax.f32 %v2057, 0.0
      %v2122 = vmax.f32 %v2062, 0.0
      %v2123 = vmax.f32 %v2065, 0.0
      %v2124 = vmax.f32 %v2070, 0.0
      %v2125 = vmax.f32 %v2073, 0.0
      %v2126 = vmax.f32 %v2078, 0.0
      %v2127 = vmax.f32 %v2081, 0.0
      %v2128 = vmax.f32 %v2086, 0.0
      %v2129 = vmax.f32 %v2089, 0.0
      %v2130 = vmax.f32 %v2094, 0.0
      %v2131 = vmax.f32 %v2097, 0.0
      %2132 = vst [vmem:[%s424] sm:$0xff] %v2100
      %2133 = vst [vmem:[%s424 + $0x8] sm:$0xff] %v2101
      %2134 = vst [vmem:[%s424 + $0x10] sm:$0xff] %v2102
      %2135 = vst [vmem:[%s424 + $0x18] sm:$0xff] %v2103
      %2136 = vst [vmem:[%s424 + $0x20] sm:$0xff] %v2104
      %2137 = vst [vmem:[%s424 + $0x28] sm:$0xff] %v2105
      %2138 = vst [vmem:[%s424 + $0x30] sm:$0xff] %v2106
      %2139 = vst [vmem:[%s424 + $0x38] sm:$0xff] %v2107
      %2140 = vst [vmem:[%s424 + $0x40] sm:$0xff] %v2108
      %2141 = vst [vmem:[%s424 + $0x48] sm:$0xff] %v2109
      %2142 = vst [vmem:[%s424 + $0x50] sm:$0xff] %v2110
      %2143 = vst [vmem:[%s424 + $0x58] sm:$0xff] %v2111
      %2144 = vst [vmem:[%s424 + $0x60] sm:$0xff] %v2112
      %2145 = vst [vmem:[%s424 + $0x68] sm:$0xff] %v2113
      %2146 = vst [vmem:[%s424 + $0x70] sm:$0xff] %v2114
      %2147 = vst [vmem:[%s424 + $0x78] sm:$0xff] %v2115
      %2148 = vst [vmem:[%s424 + $0x80] sm:$0xff] %v2116
      %2149 = vst [vmem:[%s424 + $0x88] sm:$0xff] %v2117
      %2150 = vst [vmem:[%s424 + $0x90] sm:$0xff] %v2118
      %2151 = vst [vmem:[%s424 + $0x98] sm:$0xff] %v2119
      %2152 = vst [vmem:[%s424 + $0xa0] sm:$0xff] %v2120
      %2153 = vst [vmem:[%s424 + $0xa8] sm:$0xff] %v2121
      %2154 = vst [vmem:[%s424 + $0xb0] sm:$0xff] %v2122
      %2155 = vst [vmem:[%s424 + $0xb8] sm:$0xff] %v2123
      %2156 = vst [vmem:[%s424 + $0xc0] sm:$0xff] %v2124
      %2157 = vst [vmem:[%s424 + $0xc8] sm:$0xff] %v2125
      %2158 = vst [vmem:[%s424 + $0xd0] sm:$0xff] %v2126
      %2159 = vst [vmem:[%s424 + $0xd8] sm:$0xff] %v2127
      %2160 = vst [vmem:[%s424 + $0xe0] sm:$0xff] %v2128
      %2161 = vst [vmem:[%s424 + $0xe8] sm:$0xff] %v2129
      %2162 = vst [vmem:[%s424 + $0xf0] sm:$0xff] %v2130
      %2163 = vst [vmem:[%s424 + $0xf8] sm:$0xff] %v2131
      %v2164 = vld [vmem:[%s406] sm:$0xff]
      %v2165 = vld [vmem:[%s406 + $0x8] sm:$0xff]
      %v2166 = vld [vmem:[%s406 + $0x10] sm:$0xff]
      %v2167 = vld [vmem:[%s406 + $0x18] sm:$0xff]
      %v2168 = vld [vmem:[%s406 + $0x20] sm:$0xff]
      %v2169 = vld [vmem:[%s406 + $0x28] sm:$0xff]
      %v2170 = vld [vmem:[%s406 + $0x30] sm:$0xff]
      %v2171 = vld [vmem:[%s406 + $0x38] sm:$0xff]
      %v2172 = vld [vmem:[%s406 + $0x40] sm:$0xff]
      %v2173 = vld [vmem:[%s406 + $0x48] sm:$0xff]
      %v2174 = vld [vmem:[%s406 + $0x50] sm:$0xff]
      %v2175 = vld [vmem:[%s406 + $0x58] sm:$0xff]
      %v2176 = vld [vmem:[%s406 + $0x60] sm:$0xff]
      %v2177 = vld [vmem:[%s406 + $0x68] sm:$0xff]
      %v2178 = vld [vmem:[%s406 + $0x70] sm:$0xff]
      %v2179 = vld [vmem:[%s406 + $0x78] sm:$0xff]
      %v2180 = vld [vmem:[%s406 + $0x80] sm:$0xff]
      %v2181 = vld [vmem:[%s406 + $0x88] sm:$0xff]
      %v2182 = vld [vmem:[%s406 + $0x90] sm:$0xff]
      %v2183 = vld [vmem:[%s406 + $0x98] sm:$0xff]
      %v2184 = vld [vmem:[%s406 + $0xa0] sm:$0xff]
      %v2185 = vld [vmem:[%s406 + $0xa8] sm:$0xff]
      %v2186 = vld [vmem:[%s406 + $0xb0] sm:$0xff]
      %v2187 = vld [vmem:[%s406 + $0xb8] sm:$0xff]
      %v2188 = vld [vmem:[%s406 + $0xc0] sm:$0xff]
      %v2189 = vld [vmem:[%s406 + $0xc8] sm:$0xff]
      %v2190 = vld [vmem:[%s406 + $0xd0] sm:$0xff]
      %v2191 = vld [vmem:[%s406 + $0xd8] sm:$0xff]
      %v2192 = vld [vmem:[%s406 + $0xe0] sm:$0xff]
      %v2193 = vld [vmem:[%s406 + $0xe8] sm:$0xff]
      %v2194 = vld [vmem:[%s406 + $0xf0] sm:$0xff]
      %v2195 = vld [vmem:[%s406 + $0xf8] sm:$0xff]
      %v2196 = vmul.f32 %v716, 0.1
      %v2197 = vmul.f32 %v717, 0.1
      %v2198 = vmul.f32 %v718, 0.1
      %v2199 = vmul.f32 %v719, 0.1
      %v2200 = vmul.f32 %v720, 0.1
      %v2201 = vmul.f32 %v721, 0.1
      %v2202 = vmul.f32 %v722, 0.1
      %v2203 = vmul.f32 %v723, 0.1
      %v2204 = vmul.f32 %v724, 0.1
      %v2205 = vmul.f32 %v725, 0.1
      %v2206 = vmul.f32 %v726, 0.1
      %v2207 = vmul.f32 %v727, 0.1
      %v2208 = vmul.f32 %v728, 0.1
      %v2209 = vmul.f32 %v729, 0.1
      %v2210 = vmul.f32 %v730, 0.1
      %v2211 = vmul.f32 %v731, 0.1
      %v2212 = vmul.f32 %v732, 0.1
      %v2213 = vmul.f32 %v733, 0.1
      %v2214 = vmul.f32 %v734, 0.1
      %v2215 = vmul.f32 %v735, 0.1
      %v2216 = vmul.f32 %v736, 0.1
      %v2217 = vmul.f32 %v737, 0.1
      %v2218 = vmul.f32 %v738, 0.1
      %v2219 = vmul.f32 %v739, 0.1
      %v2220 = vmul.f32 %v740, 0.1
      %v2221 = vmul.f32 %v741, 0.1
      %v2222 = vmul.f32 %v742, 0.1
      %v2223 = vmul.f32 %v743, 0.1
      %v2224 = vmul.f32 %v744, 0.1
      %v2225 = vmul.f32 %v745, 0.1
      %v2226 = vmul.f32 %v746, 0.1
      %v2227 = vmul.f32 %v747, 0.1
      %v2228 = vadd.f32 %v2164, %v2196
      %v2229 = vadd.f32 %v2165, %v2197
      %v2230 = vadd.f32 %v2166, %v2198
      %v2231 = vadd.f32 %v2167, %v2199
      %v2232 = vadd.f32 %v2168, %v2200
      %v2233 = vadd.f32 %v2169, %v2201
      %v2234 = vadd.f32 %v2170, %v2202
      %v2235 = vadd.f32 %v2171, %v2203
      %v2236 = vadd.f32 %v2172, %v2204
      %v2237 = vadd.f32 %v2173, %v2205
      %v2238 = vadd.f32 %v2174, %v2206
      %v2239 = vadd.f32 %v2175, %v2207
      %v2240 = vadd.f32 %v2176, %v2208
      %v2241 = vadd.f32 %v2177, %v2209
      %v2242 = vadd.f32 %v2178, %v2210
      %v2243 = vadd.f32 %v2179, %v2211
      %v2244 = vadd.f32 %v2180, %v2212
      %v2245 = vadd.f32 %v2181, %v2213
      %v2246 = vadd.f32 %v2182, %v2214
      %v2247 = vadd.f32 %v2183, %v2215
      %v2248 = vadd.f32 %v2184, %v2216
      %v2249 = vadd.f32 %v2185, %v2217
      %v2250 = vadd.f32 %v2186, %v2218
      %v2251 = vadd.f32 %v2187, %v2219
      %v2252 = vadd.f32 %v2188, %v2220
      %v2253 = vadd.f32 %v2189, %v2221
      %v2254 = vadd.f32 %v2190, %v2222
      %v2255 = vadd.f32 %v2191, %v2223
      %v2256 = vadd.f32 %v2192, %v2224
      %v2257 = vadd.f32 %v2193, %v2225
      %v2258 = vadd.f32 %v2194, %v2226
      %v2259 = vadd.f32 %v2195, %v2227
      %2260 = vst.msk [vmem:[%s418] sm:$0xff] %vm876, %v2228
      %2261 = vst.msk [vmem:[%s418 + $0x8] sm:$0xff] %vm876, %v2229
      %2262 = vst.msk [vmem:[%s418 + $0x10] sm:$0xff] %vm876, %v2230
      %2263 = vst.msk [vmem:[%s418 + $0x18] sm:$0xff] %vm876, %v2231
      %2264 = vst.msk [vmem:[%s418 + $0x20] sm:$0xff] %vm876, %v2232
      %2265 = vst.msk [vmem:[%s418 + $0x28] sm:$0xff] %vm876, %v2233
      %2266 = vst.msk [vmem:[%s418 + $0x30] sm:$0xff] %vm876, %v2234
      %2267 = vst.msk [vmem:[%s418 + $0x38] sm:$0xff] %vm876, %v2235
      %2268 = vst.msk [vmem:[%s418 + $0x40] sm:$0xff] %vm876, %v2236
      %2269 = vst.msk [vmem:[%s418 + $0x48] sm:$0xff] %vm876, %v2237
      %2270 = vst.msk [vmem:[%s418 + $0x50] sm:$0xff] %vm876, %v2238
      %2271 = vst.msk [vmem:[%s418 + $0x58] sm:$0xff] %vm876, %v2239
      %2272 = vst.msk [vmem:[%s418 + $0x60] sm:$0xff] %vm876, %v2240
      %2273 = vst.msk [vmem:[%s418 + $0x68] sm:$0xff] %vm876, %v2241
      %2274 = vst.msk [vmem:[%s418 + $0x70] sm:$0xff] %vm876, %v2242
      %2275 = vst.msk [vmem:[%s418 + $0x78] sm:$0xff] %vm876, %v2243
      %2276 = vst.msk [vmem:[%s418 + $0x80] sm:$0xff] %vm876, %v2244
      %2277 = vst.msk [vmem:[%s418 + $0x88] sm:$0xff] %vm876, %v2245
      %2278 = vst.msk [vmem:[%s418 + $0x90] sm:$0xff] %vm876, %v2246
      %2279 = vst.msk [vmem:[%s418 + $0x98] sm:$0xff] %vm876, %v2247
      %2280 = vst.msk [vmem:[%s418 + $0xa0] sm:$0xff] %vm876, %v2248
      %2281 = vst.msk [vmem:[%s418 + $0xa8] sm:$0xff] %vm876, %v2249
      %2282 = vst.msk [vmem:[%s418 + $0xb0] sm:$0xff] %vm876, %v2250
      %2283 = vst.msk [vmem:[%s418 + $0xb8] sm:$0xff] %vm876, %v2251
      %2284 = vst.msk [vmem:[%s418 + $0xc0] sm:$0xff] %vm876, %v2252
      %2285 = vst.msk [vmem:[%s418 + $0xc8] sm:$0xff] %vm876, %v2253
      %2286 = vst.msk [vmem:[%s418 + $0xd0] sm:$0xff] %vm876, %v2254
      %2287 = vst.msk [vmem:[%s418 + $0xd8] sm:$0xff] %vm876, %v2255
      %2288 = vst.msk [vmem:[%s418 + $0xe0] sm:$0xff] %vm876, %v2256
      %2289 = vst.msk [vmem:[%s418 + $0xe8] sm:$0xff] %vm876, %v2257
      %2290 = vst.msk [vmem:[%s418 + $0xf0] sm:$0xff] %vm876, %v2258
      %2291 = vst.msk [vmem:[%s418 + $0xf8] sm:$0xff] %vm876, %v2259
      %s2292 = smul.u32 32, %s23
      %p2293 = scmp.lt.s32.totalorder %s2292, 255
      %s2294 = scalar_select %p2293, %s2292, 255
      %s2295 = smul.addr %s2294, 8
      %s2296 = scalar_lea.vmem %s10, %s2295
      %s2297 = smul.u32 32, %s23
      %p2298 = scmp.lt.s32.totalorder %s2297, 255
      %s2299 = scalar_select %p2298, %s2297, 255
      %s2300 = smul.addr %s2299, 8
      %s2301 = scalar_lea.vmem %s11, %s2300
      // Predicated region
      $region61: #{middle_decoder_forward.1} parent=59 // pred_check
        %p2302 = pneg %p261
      $region62: #{middle_decoder_forward.1} parent=59 // pred_check_branch
        %2304 = sbr.rel (%p2302) target = $region64
      $region63: #{middle_decoder_forward.1} parent=59 // pred_region
        %s2305 = smul.u32 32, %s23
      $region64: #{middle_decoder_forward.1} parent=59 // pred_fallthru
        _
      // Predicated region
      $region65: #{middle_decoder_forward.1} parent=59 // pred_check
        %p2306 = pneg %p287
      $region66: #{middle_decoder_forward.1} parent=59 // pred_check_branch
        %2308 = sbr.rel (%p2306) target = $region68
      $region67: #{middle_decoder_forward.1} parent=59 // pred_region
        %s2309 = smul.u32 32, %s23
      $region68: #{middle_decoder_forward.1} parent=59 // pred_fallthru
        _
    $region60: #{middle_decoder_forward.1} parent=5 // pred_fallthru
      _
    %p2310 = scmp.le.s32.totalorder 2, %s18
    // Predicated region
    $region69: #{middle_decoder_forward.1} parent=5 // pred_check
      %p2311 = pneg %p2310
    $region70: #{middle_decoder_forward.1} parent=5 // pred_check_branch
      %2313 = sbr.rel (%p2311) target = $region72
    $region71: #{middle_decoder_forward.1} parent=5 // pred_region
      %s2314 = ssub.s32 %s18, 2
      // Predicated region
      $region73: #{middle_decoder_forward.1} parent=71 // pred_check
        %p2315 = pneg %p267
      $region74: #{middle_decoder_forward.1} parent=71 // pred_check_branch
        %2317 = sbr.rel (%p2315) target = $region76
      $region75: #{middle_decoder_forward.1} parent=71 // pred_region
        %s2318 = smul.u32 32, %s24
        %p2319 = scmp.lt.s32.totalorder %s2318, 255
        %s2320 = scalar_select %p2319, %s2318, 255
        %s2321 = smul.addr %s2320, 8
        %s2322 = scalar_lea.vmem %s10, %s2321
      $region76: #{middle_decoder_forward.1} parent=71 // pred_fallthru
        _
      // Predicated region
      $region77: #{middle_decoder_forward.1} parent=71 // pred_check
        %p2323 = pneg %p293
      $region78: #{middle_decoder_forward.1} parent=71 // pred_check_branch
        %2325 = sbr.rel (%p2323) target = $region80
      $region79: #{middle_decoder_forward.1} parent=71 // pred_region
        %s2326 = smul.u32 32, %s24
        %p2327 = scmp.lt.s32.totalorder %s2326, 255
        %s2328 = scalar_select %p2327, %s2326, 255
        %s2329 = smul.addr %s2328, 8
        %s2330 = scalar_lea.vmem %s11, %s2329
      $region80: #{middle_decoder_forward.1} parent=71 // pred_fallthru
        _
    $region72: #{middle_decoder_forward.1} parent=5 // pred_fallthru
      _
  $region6: #{middle_decoder_forward.1} parent=0 // loop_footer
    %s22 = sadd.s32 1, %s18
  $region7: #{middle_decoder_forward.1} parent=0 // loop_footer_branch
    %17 = sbr.rel target = $region3
  $region8: #{middle_decoder_forward.1} parent=0 // loop_exit
    _

</llo_original>
